<compile_context>
chip_gen: v5e
topology: v5e:2x2
jax: 0.10.0
libtpu: 0.0.40
codegen_flags: <defaults>
</compile_context>

<pallas_src>
import functools
import math

import jax
import jax.numpy as jnp
from jax.experimental import pallas as pl
from jax.experimental.pallas import tpu as pltpu


def _round_up(x, m):
    return ((x + m - 1) // m) * m


def _pick_vmem_limit():
    # v5e/v6e: 128 MiB VMEM per TC -> allow bigger tiles; v7x: 64 MiB -> keep 48 MiB cap.
    try:
        cap = pltpu.get_tpu_info().vmem_capacity_bytes
    except Exception:
        cap = 64 * 1024 * 1024
    return 96 * 1024 * 1024 if cap >= 100 * 1024 * 1024 else 48 * 1024 * 1024


_VMEM_LIMIT = _pick_vmem_limit()


# ----------------------------------------------------------------------------
# Tile-size heuristics for the generic matmul (conv1_1 im2col + fc head)
# ----------------------------------------------------------------------------
def _choose_tn(N):
    if N <= 256:          # full-extent lane block: no N padding, no downstream slices
        return N
    if N >= 2048:         # fc head weight streaming
        return 1024
    return _round_up(N, 128)


def _choose_tk(K):
    if K <= 4608:         # all VGG convs (<=9*512) and fc2/fc3 (4096): single K step
        return K
    # largest divisor of K that is a multiple of 128 and <= 4096 (fc1: 25088 -> 3584)
    for cand in range(4096, 127, -128):
        if K % cand == 0:
            return cand
    return 2048           # generic fallback (pads K)


def _choose_tm(M, tk):
    m16 = _round_up(M, 16)
    budget = (8 * 1024 * 1024) // (2 * max(tk, 1))       # keep A tile (bf16) around <= 8 MiB
    budget = max(128, min(1024, (budget // 128) * 128))
    if m16 <= budget:
        return m16
    best_tm, best_mp = budget, _round_up(M, budget)
    for cand in range(16, budget + 1, 16):
        mp = _round_up(M, cand)
        if mp < best_mp or (mp == best_mp and cand > best_tm):
            best_tm, best_mp = cand, mp
    return best_tm


# ----------------------------------------------------------------------------
# Generic tiled matmul: bf16 operands, f32 accumulation, fused bias + ReLU.
# Single-K-step variant skips the accumulator scratch (review item: acc bypass).
# ----------------------------------------------------------------------------
def _mm_kernel_single(a_ref, b_ref, bias_ref, o_ref, *, relu):
    r = jnp.dot(a_ref[...], b_ref[...], preferred_element_type=jnp.float32) + bias_ref[...]
    if relu:
        r = jnp.maximum(r, 0.0)
    o_ref[...] = r.astype(o_ref.dtype)


def _mm_kernel_multi(a_ref, b_ref, bias_ref, o_ref, acc_ref, *, relu):
    @pl.when(pl.program_id(2) == 0)
    def _():
        acc_ref[...] = jnp.zeros_like(acc_ref)

    acc_ref[...] += jnp.dot(a_ref[...], b_ref[...], preferred_element_type=jnp.float32)

    @pl.when(pl.program_id(2) == pl.num_programs(2) - 1)
    def _():
        r = acc_ref[...] + bias_ref[...]
        if relu:
            r = jnp.maximum(r, 0.0)
        o_ref[...] = r.astype(o_ref.dtype)


@functools.lru_cache(maxsize=None)
def _build_matmul(Mp, Kp, Np, tm, tk, tn, relu, out_dtype):
    if Kp == tk:
        return pl.pallas_call(
            functools.partial(_mm_kernel_single, relu=relu),
            out_shape=jax.ShapeDtypeStruct((Mp, Np), out_dtype),
            grid_spec=pltpu.PrefetchScalarGridSpec(
                num_scalar_prefetch=0,
                grid=(Mp // tm, Np // tn),
                in_specs=[
                    pl.BlockSpec((tm, tk), lambda i, j: (i, 0)),
                    pl.BlockSpec((tk, tn), lambda i, j: (0, j)),
                    pl.BlockSpec((1, tn), lambda i, j: (0, j)),
                ],
                out_specs=pl.BlockSpec((tm, tn), lambda i, j: (i, j)),
            ),
            compiler_params=pltpu.CompilerParams(
                dimension_semantics=("parallel", "parallel"),
                vmem_limit_bytes=_VMEM_LIMIT,
            ),
        )
    return pl.pallas_call(
        functools.partial(_mm_kernel_multi, relu=relu),
        out_shape=jax.ShapeDtypeStruct((Mp, Np), out_dtype),
        grid_spec=pltpu.PrefetchScalarGridSpec(
            num_scalar_prefetch=0,
            grid=(Mp // tm, Np // tn, Kp // tk),
            in_specs=[
                pl.BlockSpec((tm, tk), lambda i, j, k: (i, k)),
                pl.BlockSpec((tk, tn), lambda i, j, k: (k, j)),
                pl.BlockSpec((1, tn), lambda i, j, k: (0, j)),
            ],
            out_specs=pl.BlockSpec((tm, tn), lambda i, j, k: (i, j)),
            scratch_shapes=[pltpu.VMEM((tm, tn), jnp.float32)],
        ),
        compiler_params=pltpu.CompilerParams(
            dimension_semantics=("parallel", "parallel", "arbitrary"),
            vmem_limit_bytes=_VMEM_LIMIT,
        ),
    )


def _prepare_matmul_weight(wm_f32, bias_f32):
    """bf16-cast, tile-pad (if needed) once at init."""
    K, N = wm_f32.shape
    tk, tn = _choose_tk(K), _choose_tn(N)
    Kp, Np = _round_up(K, tk), _round_up(N, tn)
    wm = wm_f32.astype(jnp.bfloat16)
    if Kp != K or Np != N:
        wm = jnp.pad(wm, ((0, Kp - K), (0, Np - N)))
    if bias_f32 is None:
        bias_f32 = jnp.zeros((N,), jnp.float32)
    bias = bias_f32.astype(jnp.float32)
    if Np != N:
        bias = jnp.pad(bias, (0, Np - N))
    return {"w": wm, "bias": bias.reshape(1, Np),
            "K": K, "N": N, "tk": tk, "tn": tn, "Kp": Kp, "Np": Np}


def _prepare_conv_weight(w, b):
    """PyTorch (OC, IC, KH, KW) -> matmul operand (KH*KW*IC, OC), row order (kh, kw, ic)."""
    OC, IC, KH, KW = w.shape
    wm = jnp.transpose(w, (2, 3, 1, 0)).reshape(KH * KW * IC, OC)
    return _prepare_matmul_weight(wm, b)


def matmul_bias_act(a, pw, relu=False, out_dtype=jnp.bfloat16):
    M, K = a.shape
    assert K == pw["K"], (K, pw["K"])
    tm = _choose_tm(M, pw["tk"])
    Mp = _round_up(M, tm)
    if a.dtype != jnp.bfloat16:
        a = a.astype(jnp.bfloat16)
    if Mp != M or pw["Kp"] != K:
        a = jnp.pad(a, ((0, Mp - M), (0, pw["Kp"] - K)))
    out = _build_matmul(Mp, pw["Kp"], pw["Np"], tm, pw["tk"], pw["tn"],
                        bool(relu), out_dtype)(a, pw["w"], pw["bias"])
    if Mp != M or pw["Np"] != pw["N"]:
        out = out[:M, :pw["N"]]
    return out


# ----------------------------------------------------------------------------
# Fused 3x3 / stride-1 / pad-1 conv (no HBM im2col): halo'd row-band manual DMA
# + 9 in-kernel MXU taps against a VMEM-resident weight.
# ----------------------------------------------------------------------------
def _prepare_fused_conv_weight(w, b):
    OC, IC, KH, KW = w.shape
    wm = jnp.transpose(w, (2, 3, 1, 0)).reshape(KH * KW * IC, OC).astype(jnp.bfloat16)
    bias = b.astype(jnp.float32).reshape(1, OC)
    return {"w": wm, "bias": bias, "ic": IC, "oc": OC}


def _choose_row_tile(H, W):
    # smallest divisor of H whose band gives >= 2048 matmul rows (keeps MXU fed), capped at H
    for tr in range(1, H + 1):
        if H % tr == 0 and tr * W >= 2048:
            return tr
    return H


def _fused_conv_kernel(w_ref, b_ref, x_hbm, o_ref, xbuf, sem, *, tr, W, C, OC, relu):
    b = pl.program_id(0)
    i = pl.program_id(1)
    # DMA the halo'd row band [i*tr, i*tr + tr + 2) of the padded NHWC input into VMEM.
    # TODO(synk): single-buffered (blocking) fill; double-buffering would hide ~20 us/fwd more.
    cp = pltpu.make_async_copy(x_hbm.at[b, pl.ds(i * tr, tr + 2)], xbuf, sem.at[0])
    cp.start()
    cp.wait()
    acc = None
    for kh in range(3):
        for kw in range(3):
            a = xbuf[pl.ds(kh, tr), pl.ds(kw, W), :].reshape(tr * W, C)
            wk = w_ref[pl.ds((kh * 3 + kw) * C, C), :]
            d = jnp.dot(a, wk, preferred_element_type=jnp.float32)
            acc = d if acc is None else acc + d
    r = acc + b_ref[...]
    if relu:
        r = jnp.maximum(r, 0.0)
    o_ref[0] = r.astype(o_ref.dtype)


@functools.lru_cache(maxsize=None)
def _build_fused_conv(N, H, W, C, OC, tr, relu):
    return pl.pallas_call(
        functools.partial(_fused_conv_kernel, tr=tr, W=W, C=C, OC=OC, relu=relu),
        out_shape=jax.ShapeDtypeStruct((N, H * W, OC), jnp.bfloat16),
        grid_spec=pltpu.PrefetchScalarGridSpec(
            num_scalar_prefetch=0,
            grid=(N, H // tr),
            in_specs=[
                pl.BlockSpec((9 * C, OC), lambda b, i: (0, 0)),   # weight stays VMEM-resident
                pl.BlockSpec((1, OC), lambda b, i: (0, 0)),       # bias
                pl.BlockSpec(memory_space=pl.ANY),                # padded input in HBM
            ],
            out_specs=pl.BlockSpec((1, tr * W, OC), lambda b, i: (b, i, 0)),
            scratch_shapes=[
                pltpu.VMEM((tr + 2, W + 2, C), jnp.bfloat16),
                pltpu.SemaphoreType.DMA((1,)),
            ],
        ),
        compiler_params=pltpu.CompilerParams(
            dimension_semantics=("parallel", "parallel"),
            vmem_limit_bytes=_VMEM_LIMIT,
        ),
    )


def fused_conv3x3(x, pw, relu=True):
    """x: (N, H, W, C) NHWC bf16 -> (N, H, W, OC) bf16 (3x3, stride 1, pad 1)."""
    N, H, W, C = x.shape
    assert C == pw["ic"], (C, pw["ic"])
    OC = pw["oc"]
    tr = _choose_row_tile(H, W)
    xp = jnp.pad(x, ((0, 0), (1, 1), (1, 1), (0, 0)))     # spatial zero pad, done once
    out = _build_fused_conv(N, H, W, C, OC, tr, bool(relu))(pw["w"], pw["bias"], xp)
    return out.reshape(N, H, W, OC)


# ----------------------------------------------------------------------------
# 2x2 max-pool (element-wise max over the 4 strided window views)
# TODO(synk): the 4 strided views are still materialized by XLA (~10-15 MB/fwd total);
# an in-kernel stride-2 window reduce would remove that but is left out for robustness.
# ----------------------------------------------------------------------------
def _max4_kernel(a_ref, b_ref, c_ref, d_ref, o_ref):
    o_ref[...] = jnp.maximum(
        jnp.maximum(a_ref[...], b_ref[...]), jnp.maximum(c_ref[...], d_ref[...])
    )


@functools.lru_cache(maxsize=None)
def _build_max4(Mp, C, dtype):
    return pl.pallas_call(
        _max4_kernel,
        out_shape=jax.ShapeDtypeStruct((Mp, C), dtype),
        grid_spec=pltpu.PrefetchScalarGridSpec(
            num_scalar_prefetch=0,
            grid=(Mp // 256,),
            in_specs=[pl.BlockSpec((256, C), lambda i: (i, 0)) for _ in range(4)],
            out_specs=pl.BlockSpec((256, C), lambda i: (i, 0)),
        ),
        compiler_params=pltpu.CompilerParams(dimension_semantics=("parallel",)),
    )


def maxpool2x2(x):
    N, H, W, C = x.shape
    OH, OW = H // 2, W // 2
    M = N * OH * OW
    Mp = _round_up(M, 256)
    parts = []
    for dh in (0, 1):
        for dw in (0, 1):
            p = x[:, dh::2, dw::2, :].reshape(M, C)
            if Mp != M:
                p = jnp.pad(p, ((0, Mp - M), (0, 0)))
            parts.append(p)
    out = _build_max4(Mp, C, x.dtype)(*parts)
    return out[:M].reshape(N, OH, OW, C)


# ----------------------------------------------------------------------------
# Generic conv (im2col) — only used for conv1_1 (C=3) and the fc head (1x1 / whole-window)
# ----------------------------------------------------------------------------
def conv2d_nhwc(x, pw, kh, kw, padding=0, relu=False, out_dtype=jnp.bfloat16):
    N, H, W, C = x.shape
    if padding:
        x = jnp.pad(x, ((0, 0), (padding, padding), (padding, padding), (0, 0)))
    OH = H + 2 * padding - kh + 1
    OW = W + 2 * padding - kw + 1
    if kh == 1 and kw == 1:
        a = x.reshape(N * OH * OW, C)
    elif OH == 1 and OW == 1:
        a = x.reshape(N, kh * kw * C)          # whole-window: raw (h, w, c) layout == (kh, kw, ic)
    else:
        # im2col fallback (only conv1_1: ~2.7 MB patch matrix)
        patches = jnp.concatenate(
            [x[:, dh:dh + OH, dw:dw + OW, :] for dh in range(kh) for dw in range(kw)], axis=-1)
        a = patches.reshape(N * OH * OW, kh * kw * C)
    out = matmul_bias_act(a, pw, relu=relu, out_dtype=out_dtype)
    return out.reshape(N, OH, OW, pw["N"])


# ----------------------------------------------------------------------------
# Upsampling ConvTranspose2d (23 -> 23, kernel 240, stride 32, no bias).
# For a 1x1 spatial input this is out[co,kh,kw] = sum_ci x[ci] * W[ci,co,kh,kw]:
# a VPU weighted row-sum over lane-dense (tr, 128) weight slabs; x lives in SMEM.
# ----------------------------------------------------------------------------
_UP_TR = 1024


def _prepare_upsample_weight(w):
    CI, CO, KH, KW = w.shape
    Nfull = CO * KH * KW
    assert Nfull % 128 == 0, "upsampling output size must be a multiple of 128 lanes"
    R = Nfull // 128
    Rp = _round_up(R, _UP_TR)
    w2 = w.reshape(CI, R, 128).astype(jnp.bfloat16)
    if Rp != R:
        w2 = jnp.pad(w2, ((0, 0), (0, Rp - R), (0, 0)))
    return {"w": w2, "ci": CI, "co": CO, "kh": KH, "kw": KW, "R": R, "Rp": Rp, "tr": _UP_TR}


def _up_kernel(x_ref, w_ref, o_ref, *, cin):
    b = pl.program_id(0)
    acc = x_ref[b, 0] * w_ref[0].astype(jnp.float32)
    for k in range(1, cin):
        acc = acc + x_ref[b, k] * w_ref[k].astype(jnp.float32)
    o_ref[0] = acc


@functools.lru_cache(maxsize=None)
def _build_upsample(Nb, CI, Rp, tr):
    return pl.pallas_call(
        functools.partial(_up_kernel, cin=CI),
        out_shape=jax.ShapeDtypeStruct((Nb, Rp, 128), jnp.float32),
        grid_spec=pltpu.PrefetchScalarGridSpec(
            num_scalar_prefetch=0,
            grid=(Nb, Rp // tr),
            in_specs=[
                pl.BlockSpec(memory_space=pltpu.MemorySpace.SMEM),       # class logits (Nb, CI)
                pl.BlockSpec((CI, tr, 128), lambda b, i: (0, i, 0)),     # weight slab
            ],
            out_specs=pl.BlockSpec((1, tr, 128), lambda b, i: (b, i, 0)),
        ),
        compiler_params=pltpu.CompilerParams(
            dimension_semantics=("parallel", "parallel"),
            vmem_limit_bytes=_VMEM_LIMIT,
        ),
    )


def upsample_1x1(x2d, pup):
    """x2d: (Nb, >=CI) f32 class logits -> (Nb, CO, KH, KW) f32."""
    Nb = x2d.shape[0]
    xs = x2d[:, :pup["ci"]].astype(jnp.float32)
    out = _build_upsample(Nb, pup["ci"], pup["Rp"], pup["tr"])(xs, pup["w"])
    return out[:, :pup["R"], :].reshape(Nb, pup["co"], pup["kh"], pup["kw"])


def conv_transpose2d(feat, pup, stride):
    """feat: (N, IH, IW, C) NHWC f32 (first CI channels valid). Returns NCHW f32."""
    N, IH, IW, _ = feat.shape
    kh, kw, co = pup["kh"], pup["kw"], pup["co"]
    if IH == 1 and IW == 1:
        return upsample_1x1(feat.reshape(N, -1), pup)
    # TODO(synk): general path (inputs > 224x224) re-streams the full weight per input pixel
    # and scatter-adds in XLA; rewrite as one matmul + a Pallas col2im kernel if needed.
    OH = (IH - 1) * stride + kh
    OW = (IW - 1) * stride + kw
    out = jnp.zeros((N, co, OH, OW), jnp.float32)
    for ih in range(IH):
        for iw in range(IW):
            c = upsample_1x1(feat[:, ih, iw, :], pup)
            out = out.at[:, :, ih * stride:ih * stride + kh,
                         iw * stride:iw * stride + kw].add(c)
    return out


# ----------------------------------------------------------------------------
# SegmentationNN: parameter init (pre-packed operands) + forward
# ----------------------------------------------------------------------------
_VGG16_CFG = [64, 64, 'M', 128, 128, 'M', 256, 256, 256, 'M', 512, 512, 512, 'M',
              512, 512, 512, 'M']
NUM_CLASSES = 23
WEIGHT_SCALE = 0.001


def init_params(key):
    # TODO(synk): pretrained torchvision VGG16 weights cannot be loaded here; deterministic
    # synthetic init with identical tensor shapes, pre-packed (transposed / bf16 / padded) once.
    params = {'vgg': []}
    c_in = 3
    for v in _VGG16_CFG:
        if v == 'M':
            params['vgg'].append(None)
            continue
        key, kw_, kb = jax.random.split(key, 3)
        w = jax.random.normal(kw_, (v, c_in, 3, 3), jnp.float32) * (1.0 / math.sqrt(c_in * 9))
        b = jax.random.normal(kb, (v,), jnp.float32) * 0.01
        if c_in < 64:   # conv1_1 (3 input channels): im2col matmul path
            params['vgg'].append({'type': 'im2col', 'pw': _prepare_conv_weight(w, b)})
        else:           # all other 3x3 convs: fused (no im2col) path
            params['vgg'].append({'type': 'fused', 'pw': _prepare_fused_conv_weight(w, b)})
        c_in = v

    key, k1, k2, k3, k4, k5, k6, k7 = jax.random.split(key, 8)
    fc1_w = jax.random.normal(k1, (4096, 512, 7, 7), jnp.float32) * (1.0 / math.sqrt(512 * 49))
    fc1_b = jax.random.normal(k2, (4096,), jnp.float32) * 0.01
    fc2_w = jax.random.normal(k3, (4096, 4096, 1, 1), jnp.float32) * (1.0 / math.sqrt(4096))
    fc2_b = jax.random.normal(k4, (4096,), jnp.float32) * 0.01
    fc3_w = (jax.random.normal(k5, (NUM_CLASSES, 4096, 1, 1), jnp.float32)
             * (1.0 / math.sqrt(4096)) * WEIGHT_SCALE)
    fc3_b = jax.random.normal(k6, (NUM_CLASSES,), jnp.float32) * 0.01
    up_w = (jax.random.normal(k7, (NUM_CLASSES, NUM_CLASSES, 240, 240), jnp.float32)
            * (1.0 / math.sqrt(NUM_CLASSES)))

    params['fc1'] = _prepare_conv_weight(fc1_w, fc1_b)
    params['fc2'] = _prepare_conv_weight(fc2_w, fc2_b)
    params['fc3'] = _prepare_conv_weight(fc3_w, fc3_b)
    params['up'] = _prepare_upsample_weight(up_w)
    return params


def segmentation_nn_forward(x_nchw, params):
    """x_nchw: (N, 3, H, W), H, W >= 224. Returns NCHW f32 logits."""
    x = jnp.transpose(x_nchw, (0, 2, 3, 1)).astype(jnp.bfloat16)   # -> NHWC bf16

    # VGG16 feature extractor: 3x3 conv (pad 1) + ReLU, 5 max-pools.
    for layer in params['vgg']:
        if layer is None:
            x = maxpool2x2(x)
        elif layer['type'] == 'im2col':
            x = conv2d_nhwc(x, layer['pw'], 3, 3, padding=1, relu=True)
        else:
            x = fused_conv3x3(x, layer['pw'], relu=True)

    # Classifier head: fc1 (7x7), ReLU, Dropout(p=0)=identity, fc2 (1x1), ReLU,
    # Dropout(p=0)=identity, fc3 (1x1).
    x = conv2d_nhwc(x, params['fc1'], 7, 7, padding=0, relu=True)
    x = conv2d_nhwc(x, params['fc2'], 1, 1, padding=0, relu=True)
    x = conv2d_nhwc(x, params['fc3'], 1, 1, padding=0, relu=False, out_dtype=jnp.float32)

    # Upsampling: ConvTranspose2d(23 -> 23, kernel 240, stride 32, no bias).
    return conv_transpose2d(x, params['up'], stride=32)             # (N, 23, OH, OW) f32


if __name__ == "__main__":
    key = jax.random.PRNGKey(0)
    key, pkey, xkey = jax.random.split(key, 3)

    params = init_params(pkey)
    # Smallest input consistent with the architecture (VGG /32 + 7x7 valid conv): 224x224.
    x = jax.random.normal(xkey, (1, 3, 224, 224), jnp.float32)

    out = segmentation_nn_forward(x, params)
    out = jax.block_until_ready(out)

    # 224 -> VGG /32 -> 7x7 fc1 -> 1x1 head -> transpose conv: (1-1)*32 + 240 = 240.
    assert out.shape == (1, NUM_CLASSES, 240, 240), out.shape
    assert out.dtype == jnp.float32

    print("KERNEL_OK")
</pallas_src>

<mosaic_0001>
module attributes {stable_mosaic.version = 11 : i64} {
  func.func @_mm_kernel_single(%arg0: i32, %arg1: i32, %arg2: memref<1024x27xbf16, #tpu.memory_space<vmem>>, %arg3: memref<27x64xbf16, #tpu.memory_space<vmem>>, %arg4: memref<1x64xf32, #tpu.memory_space<vmem>>, %arg5: memref<1024x64xbf16, #tpu.memory_space<vmem>>) attributes {dimension_semantics = [#tpu.dimension_semantics<parallel>, #tpu.dimension_semantics<parallel>], iteration_bounds = array<i64: 49, 1>, scalar_prefetch = 0 : i64, scratch_operands = 0 : i64, tpu.core_type = #tpu.core_type<tc>, window_params = [{transform_indices = @transform_0, window_bounds = array<i64: 1024, 27>}, {transform_indices = @transform_1, window_bounds = array<i64: 27, 64>}, {transform_indices = @transform_2, window_bounds = array<i64: 1, 64>}, {transform_indices = @transform_3, window_bounds = array<i64: 1024, 64>}]} {
    %c0 = arith.constant 0 : index
    %c0_0 = arith.constant 0 : index
    %0 = vector.load %arg2[%c0, %c0_0] : memref<1024x27xbf16, #tpu.memory_space<vmem>>, vector<1024x27xbf16>
    %c0_1 = arith.constant 0 : index
    %c0_2 = arith.constant 0 : index
    %1 = vector.load %arg3[%c0_1, %c0_2] : memref<27x64xbf16, #tpu.memory_space<vmem>>, vector<27x64xbf16>
    %cst = arith.constant dense<0.000000e+00> : vector<1024x64xf32>
    %2 = tpu.matmul %0, %1, %cst {dimension_numbers = #tpu.dot_dimension_numbers<[1], [0], [0], [1], [0, 0, 1, 1], [], []>} : vector<1024x27xbf16>, vector<27x64xbf16>, vector<1024x64xf32> -> vector<1024x64xf32>
    %c0_3 = arith.constant 0 : index
    %c0_4 = arith.constant 0 : index
    %3 = vector.load %arg4[%c0_3, %c0_4] : memref<1x64xf32, #tpu.memory_space<vmem>>, vector<1x64xf32>
    %4 = vector.broadcast %3 : vector<1x64xf32> to vector<1024x64xf32>
    %5 = arith.addf %2, %4 : vector<1024x64xf32>
    %cst_5 = arith.constant 0.000000e+00 : f32
    %6 = vector.broadcast %cst_5 : f32 to vector<1024x64xf32>
    %7 = arith.maximumf %5, %6 : vector<1024x64xf32>
    %8 = arith.truncf %7 : vector<1024x64xf32> to vector<1024x64xbf16>
    %c0_6 = arith.constant 0 : index
    %c0_7 = arith.constant 0 : index
    %9 = vector.load %arg5[%c0_6, %c0_7] : memref<1024x64xbf16, #tpu.memory_space<vmem>>, vector<1024x64xbf16>
    tpu.vector_store %arg5[%c0_6, %c0_7], %8 {strides = array<i32>} : memref<1024x64xbf16, #tpu.memory_space<vmem>>, vector<1024x64xbf16>,
    return
  }
  func.func @transform_0(%arg0: i32, %arg1: i32) -> (i32, i32) {
    %c0_i32 = arith.constant 0 : i32
    %c0_i32_0 = arith.constant 0 : i32
    return %arg0, %c0_i32 : i32, i32
  }
  func.func @transform_1(%arg0: i32, %arg1: i32) -> (i32, i32) {
    %c0_i32 = arith.constant 0 : i32
    %c0_i32_0 = arith.constant 0 : i32
    return %c0_i32, %arg1 : i32, i32
  }
  func.func @transform_2(%arg0: i32, %arg1: i32) -> (i32, i32) {
    %c0_i32 = arith.constant 0 : i32
    %c0_i32_0 = arith.constant 0 : i32
    return %c0_i32, %arg1 : i32, i32
  }
  func.func @transform_3(%arg0: i32, %arg1: i32) -> (i32, i32) {
    %c0_i32 = arith.constant 0 : i32
    return %arg0, %arg1 : i32, i32
  }
}

</mosaic_0001>

<llo_original>
// kernel: tpu_custom_call.1
$region0: #{tpu_custom_call.1}
  #allocation0 [shape = 'u32[]', space=smem, size = 0x4, offset = 0x4, fixed_abs, tag = 'smem constant byte address 0x4 - core index']
  #allocation1 [shape = 'u32[72,128]{1,0:T(1,128)}', space=vmem, size = 0x9000, scoped, tag = 'internal scratch']
  %s0 = inlined_call_operand.vmem [shape: bf16[50176,27], index: 0, kind: input, shape index: {}]
  %s1 = inlined_call_operand.vmem [shape: bf16[27,64], index: 1, kind: input, shape index: {}]
  %s2 = inlined_call_operand.vmem [shape: f32[1,64], index: 2, kind: input, shape index: {}]
  %s3 = inlined_call_operand.vmem [shape: bf16[50176,64], index: 3, kind: output, shape index: {}]
  %s4 = sld [smem:[#allocation0]]
  $region45: #{tpu_custom_call.1} parent=0
    _
  %s6 = ssub.s32 1, %s4
  %s7 = scalar_select 0, %s6, %s4
  loop: start=0, step=1, limit=51
  $region2: #{tpu_custom_call.1} parent=0 // loop_pre_header
    _
  $region3: #{tpu_custom_call.1} parent=0 // loop_header
    %s9 = sphi 0, %s13
    %p10 = scmp.ge.s32.totalorder %s9, 51
    %s16 = sphi 0, %s28
    %s17 = sphi 0, %s24
    %s18 = sphi 0, %s16
    %s19 = sphi 0, %s17
    %s20 = sphi 0, %s18
    %s21 = sphi 0, %s19
    %s31 = sphi 0, %s33
    %s34 = sphi 0, %s31
    %s35 = sphi 0, %s34
    %s51 = sphi 0, %s35
    %s57 = sphi 0, %s59
    %s60 = sphi 0, %s57
    %s61 = sphi 0, %s60
    %s77 = sphi 0, %s61
    %s83 = sphi 0, %s85
    %s86 = sphi 0, %s83
    %s87 = sphi 0, %s86
    %s103 = sphi 0, %s87
    %s111 = sphi 0, %s113
    %s114 = sphi 0, %s111
    %s115 = sphi 0, %s114
    %s131 = sphi 0, %s115
  $region4: #{tpu_custom_call.1} parent=0 // loop_header_branch
    %12 = sbr.rel (%p10) target = $region8
  $region5: #{tpu_custom_call.1} parent=0 // loop_body
    %s14 = ssub.s32 %s9, 1
    %s15 = ssub.s32 %s9, 2
    %s22 = sadd.s32 1, %s17
    %p23 = scmp.ge.s32.totalorder %s22, 1
    %s24 = scalar_select %p23, 0, %s22
    %s25 = sadd.s32 1, %s16
    %s26 = scalar_select %p23, %s25, %s16
    %p27 = scmp.ge.s32.totalorder %s26, 49
    %s28 = scalar_select %p27, 0, %s26
    %s29 = ssub.s32 %s16, %s28
    %p30 = scmp.eq.s32.totalorder %s29, 0
    %s32 = sadd.s32 %s31, 1
    %s33 = scalar_select %p30, %s31, %s32
    %p36 = pneg %p30
    %p37 = scmp.eq.s32.totalorder %s9, 48
    %p38 = por %p36, %p37
    %p39 = scmp.ne.s32.totalorder %s31, %s34
    %p40 = scmp.eq.s32.totalorder %s9, 0
    %p41 = por %p39, %p40
    %p42 = scmp.ne.s32.totalorder %s31, %s34
    %p43 = scmp.eq.s32.totalorder %s14, 48
    %p44 = por %p42, %p43
    %p45 = scmp.ne.s32.totalorder %s34, %s35
    %p46 = scmp.eq.s32.totalorder %s14, 0
    %p47 = por %p45, %p46
    %p48 = scmp.ne.s32.totalorder %s34, %s35
    %p49 = scmp.eq.s32.totalorder %s15, 48
    %p50 = por %p48, %p49
    %p52 = scmp.ne.s32.totalorder %s35, %s51
    %p53 = scmp.eq.s32.totalorder %s15, 0
    %p54 = por %p52, %p53
    %s55 = ssub.s32 %s17, %s24
    %p56 = scmp.eq.s32.totalorder %s55, 0
    %s58 = sadd.s32 %s57, 1
    %s59 = scalar_select %p56, %s57, %s58
    %p62 = pneg %p56
    %p63 = scmp.eq.s32.totalorder %s9, 48
    %p64 = por %p62, %p63
    %p65 = scmp.ne.s32.totalorder %s57, %s60
    %p66 = scmp.eq.s32.totalorder %s9, 0
    %p67 = por %p65, %p66
    %p68 = scmp.ne.s32.totalorder %s57, %s60
    %p69 = scmp.eq.s32.totalorder %s14, 48
    %p70 = por %p68, %p69
    %p71 = scmp.ne.s32.totalorder %s60, %s61
    %p72 = scmp.eq.s32.totalorder %s14, 0
    %p73 = por %p71, %p72
    %p74 = scmp.ne.s32.totalorder %s60, %s61
    %p75 = scmp.eq.s32.totalorder %s15, 48
    %p76 = por %p74, %p75
    %p78 = scmp.ne.s32.totalorder %s61, %s77
    %p79 = scmp.eq.s32.totalorder %s15, 0
    %p80 = por %p78, %p79
    %s81 = ssub.s32 %s17, %s24
    %p82 = scmp.eq.s32.totalorder %s81, 0
    %s84 = sadd.s32 %s83, 1
    %s85 = scalar_select %p82, %s83, %s84
    %p88 = pneg %p82
    %p89 = scmp.eq.s32.totalorder %s9, 48
    %p90 = por %p88, %p89
    %p91 = scmp.ne.s32.totalorder %s83, %s86
    %p92 = scmp.eq.s32.totalorder %s9, 0
    %p93 = por %p91, %p92
    %p94 = scmp.ne.s32.totalorder %s83, %s86
    %p95 = scmp.eq.s32.totalorder %s14, 48
    %p96 = por %p94, %p95
    %p97 = scmp.ne.s32.totalorder %s86, %s87
    %p98 = scmp.eq.s32.totalorder %s14, 0
    %p99 = por %p97, %p98
    %p100 = scmp.ne.s32.totalorder %s86, %s87
    %p101 = scmp.eq.s32.totalorder %s15, 48
    %p102 = por %p100, %p101
    %p104 = scmp.ne.s32.totalorder %s87, %s103
    %p105 = scmp.eq.s32.totalorder %s15, 0
    %p106 = por %p104, %p105
    %s107 = ssub.s32 %s16, %s28
    %s108 = ssub.s32 %s17, %s24
    %s109 = sor.u32 %s107, %s108
    %p110 = scmp.eq.s32.totalorder %s109, 0
    %s112 = sadd.s32 %s111, 1
    %s113 = scalar_select %p110, %s111, %s112
    %p116 = pneg %p110
    %p117 = scmp.eq.s32.totalorder %s9, 48
    %p118 = por %p116, %p117
    %p119 = scmp.ne.s32.totalorder %s111, %s114
    %p120 = scmp.eq.s32.totalorder %s9, 0
    %p121 = por %p119, %p120
    %p122 = scmp.ne.s32.totalorder %s111, %s114
    %p123 = scmp.eq.s32.totalorder %s14, 48
    %p124 = por %p122, %p123
    %p125 = scmp.ne.s32.totalorder %s114, %s115
    %p126 = scmp.eq.s32.totalorder %s14, 0
    %p127 = por %p125, %p126
    %p128 = scmp.ne.s32.totalorder %s114, %s115
    %p129 = scmp.eq.s32.totalorder %s15, 48
    %p130 = por %p128, %p129
    %p132 = scmp.ne.s32.totalorder %s115, %s131
    %p133 = scmp.eq.s32.totalorder %s15, 0
    %p134 = por %p132, %p133
    %p135 = scmp.le.s32.totalorder 1, %s9
    %p136 = scmp.lt.s32.totalorder %s9, 50
    %p137 = pnand %p135, %p136
    %p138 = pneg %p137
    // Predicated region
    $region9: #{tpu_custom_call.1} parent=5 // pred_check
      _
    $region10: #{tpu_custom_call.1} parent=5 // pred_check_branch
      %140 = sbr.rel (%p137) target = $region12
    $region11: #{tpu_custom_call.1} parent=5 // pred_region
      %s141 = ssub.s32 %s9, 1
      // Predicated region
      $region13: #{tpu_custom_call.1} parent=11 // pred_check
        %p142 = pneg %p73
      $region14: #{tpu_custom_call.1} parent=11 // pred_check_branch
        %144 = sbr.rel (%p142) target = $region16
      $region15: #{tpu_custom_call.1} parent=11 // pred_region
        %p145 = scmp.lt.s32.totalorder %s19, 0
        %s146 = scalar_select %p145, %s19, 0
        %s147 = smul.addr %s146, 4
        %s148 = scalar_lea.vmem %s1, %s147
      $region16: #{tpu_custom_call.1} parent=11 // pred_fallthru
        _
      // Predicated region
      $region17: #{tpu_custom_call.1} parent=11 // pred_check
        %p149 = pneg %p99
      $region18: #{tpu_custom_call.1} parent=11 // pred_check_branch
        %151 = sbr.rel (%p149) target = $region20
      $region19: #{tpu_custom_call.1} parent=11 // pred_region
        %p152 = scmp.lt.s32.totalorder %s19, 0
        %s153 = scalar_select %p152, %s19, 0
        %s154 = scalar_lea.vmem %s2, %s153
      $region20: #{tpu_custom_call.1} parent=11 // pred_fallthru
        _
    $region12: #{tpu_custom_call.1} parent=5 // pred_fallthru
      _
    %p155 = scmp.lt.s32.totalorder %s9, 49
    // Predicated region
    $region21: #{tpu_custom_call.1} parent=5 // pred_check
      %p156 = pneg %p155
    $region22: #{tpu_custom_call.1} parent=5 // pred_check_branch
      %158 = sbr.rel (%p156) target = $region24
    $region23: #{tpu_custom_call.1} parent=5 // pred_region
      // Predicated region
      $region25: #{tpu_custom_call.1} parent=23 // pred_check
        %p159 = pneg %p41
      $region26: #{tpu_custom_call.1} parent=23 // pred_check_branch
        %161 = sbr.rel (%p159) target = $region28
      $region27: #{tpu_custom_call.1} parent=23 // pred_region
        %s162 = smul.u32 128, %s16
        %p163 = scmp.lt.s32.totalorder %s162, 6271
        %s164 = scalar_select %p163, %s162, 6271
        %s165 = smul.addr %s164, 4
        %s166 = scalar_lea.vmem %s0, %s165
        %s167 = smul.u32 128, %s16
      $region28: #{tpu_custom_call.1} parent=23 // pred_fallthru
        _
    $region24: #{tpu_custom_call.1} parent=5 // pred_fallthru
      _
    %p168 = scmp.le.s32.totalorder 1, %s9
    %p169 = scmp.lt.s32.totalorder %s9, 50
    %p170 = pnand %p168, %p169
    %p171 = pneg %p170
    // Predicated region
    $region29: #{tpu_custom_call.1} parent=5 // pred_check
      _
    $region30: #{tpu_custom_call.1} parent=5 // pred_check_branch
      %173 = sbr.rel (%p170) target = $region32
    $region31: #{tpu_custom_call.1} parent=5 // pred_region
      %s174 = ssub.s32 %s9, 1
      %s175 = smul.u32 128, %s18
      %p176 = scmp.lt.s32.totalorder %s175, 6271
      %s177 = scalar_select %p176, %s175, 6271
      %s178 = smul.addr %s177, 4
      %s179 = scalar_lea.vmem %s0, %s178
      %p180 = pneg %p47
      %p181 = pneg %p44
      %p182 = scmp.lt.s32.totalorder %s19, 0
      %s183 = scalar_select %p182, %s19, 0
      %s184 = smul.addr %s183, 4
      %s185 = scalar_lea.vmem %s1, %s184
      %p186 = pneg %p73
      %p187 = pneg %p70
      %p188 = scmp.lt.s32.totalorder %s19, 0
      %s189 = scalar_select %p188, %s19, 0
      %s190 = scalar_lea.vmem %s2, %s189
      %p191 = pneg %p99
      %p192 = pneg %p96
      %p193 = pneg %p127
      %p194 = pneg %p124
      %s195 = smul.u32 128, %s18
      %p196 = scmp.lt.s32.totalorder %s195, 6271
      %s197 = scalar_select %p196, %s195, 6271
      %p198 = scmp.lt.s32.totalorder %s19, 0
      %s199 = scalar_select %p198, %s19, 0
      %s200 = sadd.s32 %s199, %s197
      %s201 = smul.addr %s200, 4
      %s202 = scalar_lea.vmem %s3, %s201
      %s203 = smul.u32 128, %s18
      %p204 = scmp.lt.s32.totalorder %s203, 6271
      %s205 = scalar_select %p204, %s203, 6271
      %s206 = smul.addr %s205, 4
      %s207 = scalar_lea.vmem %s0, %s206
      %s208 = smul.u32 128, %s18
      %p209 = scmp.lt.s32.totalorder %s19, 0
      %s210 = scalar_select %p209, %s19, 0
      %s211 = smul.addr %s210, 4
      %s212 = scalar_lea.vmem %s1, %s211
      %p213 = scmp.lt.s32.totalorder %s19, 0
      %s214 = scalar_select %p213, %s19, 0
      %s215 = scalar_lea.vmem %s2, %s214
      %s216 = smul.u32 128, %s18
      %p217 = scmp.lt.s32.totalorder %s216, 6271
      %s218 = scalar_select %p217, %s216, 6271
      %p219 = scmp.lt.s32.totalorder %s19, 0
      %s220 = scalar_select %p219, %s19, 0
      %s221 = sadd.s32 %s220, %s218
      %s222 = smul.addr %s221, 4
      %s223 = scalar_lea.vmem %s3, %s222
      %s224 = smul.u32 128, %s18
      %v226 = vld [vmem:[%s207] sm:$0xf]
      %v227 = vld [vmem:[%s207 + $0x4] sm:$0xf]
      %v228 = vld [vmem:[%s207 + $0x8] sm:$0xf]
      %v229 = vld [vmem:[%s207 + $0xc] sm:$0xf]
      %v230 = vld [vmem:[%s207 + $0x10] sm:$0xf]
      %v231 = vld [vmem:[%s207 + $0x14] sm:$0xf]
      %v232 = vld [vmem:[%s207 + $0x18] sm:$0xf]
      %v233 = vld [vmem:[%s207 + $0x1c] sm:$0xf]
      %v234 = vld [vmem:[%s207 + $0x20] sm:$0xf]
      %v235 = vld [vmem:[%s207 + $0x24] sm:$0xf]
      %v236 = vld [vmem:[%s207 + $0x28] sm:$0xf]
      %v237 = vld [vmem:[%s207 + $0x2c] sm:$0xf]
      %v238 = vld [vmem:[%s207 + $0x30] sm:$0xf]
      %v239 = vld [vmem:[%s207 + $0x34] sm:$0xf]
      %v240 = vld [vmem:[%s207 + $0x38] sm:$0xf]
      %v241 = vld [vmem:[%s207 + $0x3c] sm:$0xf]
      %v242 = vld [vmem:[%s207 + $0x40] sm:$0xf]
      %v243 = vld [vmem:[%s207 + $0x44] sm:$0xf]
      %v244 = vld [vmem:[%s207 + $0x48] sm:$0xf]
      %v245 = vld [vmem:[%s207 + $0x4c] sm:$0xf]
      %v246 = vld [vmem:[%s207 + $0x50] sm:$0xf]
      %v247 = vld [vmem:[%s207 + $0x54] sm:$0xf]
      %v248 = vld [vmem:[%s207 + $0x58] sm:$0xf]
      %v249 = vld [vmem:[%s207 + $0x5c] sm:$0xf]
      %v250 = vld [vmem:[%s207 + $0x60] sm:$0xf]
      %v251 = vld [vmem:[%s207 + $0x64] sm:$0xf]
      %v252 = vld [vmem:[%s207 + $0x68] sm:$0xf]
      %v253 = vld [vmem:[%s207 + $0x6c] sm:$0xf]
      %v254 = vld [vmem:[%s207 + $0x70] sm:$0xf]
      %v255 = vld [vmem:[%s207 + $0x74] sm:$0xf]
      %v256 = vld [vmem:[%s207 + $0x78] sm:$0xf]
      %v257 = vld [vmem:[%s207 + $0x7c] sm:$0xf]
      %v258 = vld [vmem:[%s207 + $0x80] sm:$0xf]
      %v259 = vld [vmem:[%s207 + $0x84] sm:$0xf]
      %v260 = vld [vmem:[%s207 + $0x88] sm:$0xf]
      %v261 = vld [vmem:[%s207 + $0x8c] sm:$0xf]
      %v262 = vld [vmem:[%s207 + $0x90] sm:$0xf]
      %v263 = vld [vmem:[%s207 + $0x94] sm:$0xf]
      %v264 = vld [vmem:[%s207 + $0x98] sm:$0xf]
      %v265 = vld [vmem:[%s207 + $0x9c] sm:$0xf]
      %v266 = vld [vmem:[%s207 + $0xa0] sm:$0xf]
      %v267 = vld [vmem:[%s207 + $0xa4] sm:$0xf]
      %v268 = vld [vmem:[%s207 + $0xa8] sm:$0xf]
      %v269 = vld [vmem:[%s207 + $0xac] sm:$0xf]
      %v270 = vld [vmem:[%s207 + $0xb0] sm:$0xf]
      %v271 = vld [vmem:[%s207 + $0xb4] sm:$0xf]
      %v272 = vld [vmem:[%s207 + $0xb8] sm:$0xf]
      %v273 = vld [vmem:[%s207 + $0xbc] sm:$0xf]
      %v274 = vld [vmem:[%s207 + $0xc0] sm:$0xf]
      %v275 = vld [vmem:[%s207 + $0xc4] sm:$0xf]
      %v276 = vld [vmem:[%s207 + $0xc8] sm:$0xf]
      %v277 = vld [vmem:[%s207 + $0xcc] sm:$0xf]
      %v278 = vld [vmem:[%s207 + $0xd0] sm:$0xf]
      %v279 = vld [vmem:[%s207 + $0xd4] sm:$0xf]
      %v280 = vld [vmem:[%s207 + $0xd8] sm:$0xf]
      %v281 = vld [vmem:[%s207 + $0xdc] sm:$0xf]
      %v282 = vld [vmem:[%s207 + $0xe0] sm:$0xf]
      %v283 = vld [vmem:[%s207 + $0xe4] sm:$0xf]
      %v284 = vld [vmem:[%s207 + $0xe8] sm:$0xf]
      %v285 = vld [vmem:[%s207 + $0xec] sm:$0xf]
      %v286 = vld [vmem:[%s207 + $0xf0] sm:$0xf]
      %v287 = vld [vmem:[%s207 + $0xf4] sm:$0xf]
      %v288 = vld [vmem:[%s207 + $0xf8] sm:$0xf]
      %v289 = vld [vmem:[%s207 + $0xfc] sm:$0xf]
      %v290 = vld [vmem:[%s207 + $0x100] sm:$0xf]
      %v291 = vld [vmem:[%s207 + $0x104] sm:$0xf]
      %v292 = vld [vmem:[%s207 + $0x108] sm:$0xf]
      %v293 = vld [vmem:[%s207 + $0x10c] sm:$0xf]
      %v294 = vld [vmem:[%s207 + $0x110] sm:$0xf]
      %v295 = vld [vmem:[%s207 + $0x114] sm:$0xf]
      %v296 = vld [vmem:[%s207 + $0x118] sm:$0xf]
      %v297 = vld [vmem:[%s207 + $0x11c] sm:$0xf]
      %v298 = vld [vmem:[%s207 + $0x120] sm:$0xf]
      %v299 = vld [vmem:[%s207 + $0x124] sm:$0xf]
      %v300 = vld [vmem:[%s207 + $0x128] sm:$0xf]
      %v301 = vld [vmem:[%s207 + $0x12c] sm:$0xf]
      %v302 = vld [vmem:[%s207 + $0x130] sm:$0xf]
      %v303 = vld [vmem:[%s207 + $0x134] sm:$0xf]
      %v304 = vld [vmem:[%s207 + $0x138] sm:$0xf]
      %v305 = vld [vmem:[%s207 + $0x13c] sm:$0xf]
      %v306 = vld [vmem:[%s207 + $0x140] sm:$0xf]
      %v307 = vld [vmem:[%s207 + $0x144] sm:$0xf]
      %v308 = vld [vmem:[%s207 + $0x148] sm:$0xf]
      %v309 = vld [vmem:[%s207 + $0x14c] sm:$0xf]
      %v310 = vld [vmem:[%s207 + $0x150] sm:$0xf]
      %v311 = vld [vmem:[%s207 + $0x154] sm:$0xf]
      %v312 = vld [vmem:[%s207 + $0x158] sm:$0xf]
      %v313 = vld [vmem:[%s207 + $0x15c] sm:$0xf]
      %v314 = vld [vmem:[%s207 + $0x160] sm:$0xf]
      %v315 = vld [vmem:[%s207 + $0x164] sm:$0xf]
      %v316 = vld [vmem:[%s207 + $0x168] sm:$0xf]
      %v317 = vld [vmem:[%s207 + $0x16c] sm:$0xf]
      %v318 = vld [vmem:[%s207 + $0x170] sm:$0xf]
      %v319 = vld [vmem:[%s207 + $0x174] sm:$0xf]
      %v320 = vld [vmem:[%s207 + $0x178] sm:$0xf]
      %v321 = vld [vmem:[%s207 + $0x17c] sm:$0xf]
      %v322 = vld [vmem:[%s207 + $0x180] sm:$0xf]
      %v323 = vld [vmem:[%s207 + $0x184] sm:$0xf]
      %v324 = vld [vmem:[%s207 + $0x188] sm:$0xf]
      %v325 = vld [vmem:[%s207 + $0x18c] sm:$0xf]
      %v326 = vld [vmem:[%s207 + $0x190] sm:$0xf]
      %v327 = vld [vmem:[%s207 + $0x194] sm:$0xf]
      %v328 = vld [vmem:[%s207 + $0x198] sm:$0xf]
      %v329 = vld [vmem:[%s207 + $0x19c] sm:$0xf]
      %v330 = vld [vmem:[%s207 + $0x1a0] sm:$0xf]
      %v331 = vld [vmem:[%s207 + $0x1a4] sm:$0xf]
      %v332 = vld [vmem:[%s207 + $0x1a8] sm:$0xf]
      %v333 = vld [vmem:[%s207 + $0x1ac] sm:$0xf]
      %v334 = vld [vmem:[%s207 + $0x1b0] sm:$0xf]
      %v335 = vld [vmem:[%s207 + $0x1b4] sm:$0xf]
      %v336 = vld [vmem:[%s207 + $0x1b8] sm:$0xf]
      %v337 = vld [vmem:[%s207 + $0x1bc] sm:$0xf]
      %v338 = vld [vmem:[%s207 + $0x1c0] sm:$0xf]
      %v339 = vld [vmem:[%s207 + $0x1c4] sm:$0xf]
      %v340 = vld [vmem:[%s207 + $0x1c8] sm:$0xf]
      %v341 = vld [vmem:[%s207 + $0x1cc] sm:$0xf]
      %v342 = vld [vmem:[%s207 + $0x1d0] sm:$0xf]
      %v343 = vld [vmem:[%s207 + $0x1d4] sm:$0xf]
      %v344 = vld [vmem:[%s207 + $0x1d8] sm:$0xf]
      %v345 = vld [vmem:[%s207 + $0x1dc] sm:$0xf]
      %v346 = vld [vmem:[%s207 + $0x1e0] sm:$0xf]
      %v347 = vld [vmem:[%s207 + $0x1e4] sm:$0xf]
      %v348 = vld [vmem:[%s207 + $0x1e8] sm:$0xf]
      %v349 = vld [vmem:[%s207 + $0x1ec] sm:$0xf]
      %v350 = vld [vmem:[%s207 + $0x1f0] sm:$0xf]
      %v351 = vld [vmem:[%s207 + $0x1f4] sm:$0xf]
      %v352 = vld [vmem:[%s207 + $0x1f8] sm:$0xf]
      %v353 = vld [vmem:[%s207 + $0x1fc] sm:$0xf]
      %v354 = vld [vmem:[%s212] sm:$0xf]
      %v355 = vld [vmem:[%s212 + $0x4] sm:$0xf]
      %v356 = vld [vmem:[%s212 + $0x8] sm:$0xf]
      %v357 = vld [vmem:[%s212 + $0xc] sm:$0x3]
      %v358 = vld [vmem:[%s215] sm:$0x1]
      %v360 = vperm.slane %v358, 0
      %v490 = vunpack.c.l.b16 %v226
      %v491 = vunpack.c.l.b16 %v227
      %v492 = vunpack.c.l.b16 %v228
      %v493 = vunpack.c.l.b16 %v229
      %v494 = vunpack.c.l.b16 %v230
      %v495 = vunpack.c.l.b16 %v231
      %v496 = vunpack.c.l.b16 %v232
      %v497 = vunpack.c.l.b16 %v233
      %v498 = vunpack.c.l.b16 %v234
      %v499 = vunpack.c.l.b16 %v235
      %v500 = vunpack.c.l.b16 %v236
      %v501 = vunpack.c.l.b16 %v237
      %v502 = vunpack.c.l.b16 %v238
      %v503 = vunpack.c.l.b16 %v239
      %v504 = vunpack.c.l.b16 %v240
      %v505 = vunpack.c.l.b16 %v241
      %v506 = vunpack.c.l.b16 %v242
      %v507 = vunpack.c.l.b16 %v243
      %v508 = vunpack.c.l.b16 %v244
      %v509 = vunpack.c.l.b16 %v245
      %v510 = vunpack.c.l.b16 %v246
      %v511 = vunpack.c.l.b16 %v247
      %v512 = vunpack.c.l.b16 %v248
      %v513 = vunpack.c.l.b16 %v249
      %v514 = vunpack.c.l.b16 %v250
      %v515 = vunpack.c.l.b16 %v251
      %v516 = vunpack.c.l.b16 %v252
      %v517 = vunpack.c.l.b16 %v253
      %v518 = vunpack.c.l.b16 %v254
      %v519 = vunpack.c.l.b16 %v255
      %v520 = vunpack.c.l.b16 %v256
      %v521 = vunpack.c.l.b16 %v257
      %v522 = vunpack.c.l.b16 %v258
      %v523 = vunpack.c.l.b16 %v259
      %v524 = vunpack.c.l.b16 %v260
      %v525 = vunpack.c.l.b16 %v261
      %v526 = vunpack.c.l.b16 %v262
      %v527 = vunpack.c.l.b16 %v263
      %v528 = vunpack.c.l.b16 %v264
      %v529 = vunpack.c.l.b16 %v265
      %v530 = vunpack.c.l.b16 %v266
      %v531 = vunpack.c.l.b16 %v267
      %v532 = vunpack.c.l.b16 %v268
      %v533 = vunpack.c.l.b16 %v269
      %v534 = vunpack.c.l.b16 %v270
      %v535 = vunpack.c.l.b16 %v271
      %v536 = vunpack.c.l.b16 %v272
      %v537 = vunpack.c.l.b16 %v273
      %v538 = vunpack.c.l.b16 %v274
      %v539 = vunpack.c.l.b16 %v275
      %v540 = vunpack.c.l.b16 %v276
      %v541 = vunpack.c.l.b16 %v277
      %v542 = vunpack.c.l.b16 %v278
      %v543 = vunpack.c.l.b16 %v279
      %v544 = vunpack.c.l.b16 %v280
      %v545 = vunpack.c.l.b16 %v281
      %v546 = vunpack.c.l.b16 %v282
      %v547 = vunpack.c.l.b16 %v283
      %v548 = vunpack.c.l.b16 %v284
      %v549 = vunpack.c.l.b16 %v285
      %v550 = vunpack.c.l.b16 %v286
      %v551 = vunpack.c.l.b16 %v287
      %v552 = vunpack.c.l.b16 %v288
      %v553 = vunpack.c.l.b16 %v289
      %v554 = vunpack.c.l.b16 %v290
      %v555 = vunpack.c.l.b16 %v291
      %v556 = vunpack.c.l.b16 %v292
      %v557 = vunpack.c.l.b16 %v293
      %v558 = vunpack.c.l.b16 %v294
      %v559 = vunpack.c.l.b16 %v295
      %v560 = vunpack.c.l.b16 %v296
      %v561 = vunpack.c.l.b16 %v297
      %v562 = vunpack.c.l.b16 %v298
      %v563 = vunpack.c.l.b16 %v299
      %v564 = vunpack.c.l.b16 %v300
      %v565 = vunpack.c.l.b16 %v301
      %v566 = vunpack.c.l.b16 %v302
      %v567 = vunpack.c.l.b16 %v303
      %v568 = vunpack.c.l.b16 %v304
      %v569 = vunpack.c.l.b16 %v305
      %v570 = vunpack.c.l.b16 %v306
      %v571 = vunpack.c.l.b16 %v307
      %v572 = vunpack.c.l.b16 %v308
      %v573 = vunpack.c.l.b16 %v309
      %v574 = vunpack.c.l.b16 %v310
      %v575 = vunpack.c.l.b16 %v311
      %v576 = vunpack.c.l.b16 %v312
      %v577 = vunpack.c.l.b16 %v313
      %v578 = vunpack.c.l.b16 %v314
      %v579 = vunpack.c.l.b16 %v315
      %v580 = vunpack.c.l.b16 %v316
      %v581 = vunpack.c.l.b16 %v317
      %v582 = vunpack.c.l.b16 %v318
      %v583 = vunpack.c.l.b16 %v319
      %v584 = vunpack.c.l.b16 %v320
      %v585 = vunpack.c.l.b16 %v321
      %v586 = vunpack.c.l.b16 %v322
      %v587 = vunpack.c.l.b16 %v323
      %v588 = vunpack.c.l.b16 %v324
      %v589 = vunpack.c.l.b16 %v325
      %v590 = vunpack.c.l.b16 %v326
      %v591 = vunpack.c.l.b16 %v327
      %v592 = vunpack.c.l.b16 %v328
      %v593 = vunpack.c.l.b16 %v329
      %v594 = vunpack.c.l.b16 %v330
      %v595 = vunpack.c.l.b16 %v331
      %v596 = vunpack.c.l.b16 %v332
      %v597 = vunpack.c.l.b16 %v333
      %v598 = vunpack.c.l.b16 %v334
      %v599 = vunpack.c.l.b16 %v335
      %v600 = vunpack.c.l.b16 %v336
      %v601 = vunpack.c.l.b16 %v337
      %v602 = vunpack.c.l.b16 %v338
      %v603 = vunpack.c.l.b16 %v339
      %v604 = vunpack.c.l.b16 %v340
      %v605 = vunpack.c.l.b16 %v341
      %v606 = vunpack.c.l.b16 %v342
      %v607 = vunpack.c.l.b16 %v343
      %v608 = vunpack.c.l.b16 %v344
      %v609 = vunpack.c.l.b16 %v345
      %v610 = vunpack.c.l.b16 %v346
      %v611 = vunpack.c.l.b16 %v347
      %v612 = vunpack.c.l.b16 %v348
      %v613 = vunpack.c.l.b16 %v349
      %v614 = vunpack.c.l.b16 %v350
      %v615 = vunpack.c.l.b16 %v351
      %v616 = vunpack.c.l.b16 %v352
      %v617 = vunpack.c.l.b16 %v353
      %v618 = vpack.c.b16 %v491, %v490
      %v619 = vpack.c.b16 %v493, %v492
      %v620 = vpack.c.b16 %v495, %v494
      %v621 = vpack.c.b16 %v497, %v496
      %v622 = vpack.c.b16 %v499, %v498
      %v623 = vpack.c.b16 %v501, %v500
      %v624 = vpack.c.b16 %v503, %v502
      %v625 = vpack.c.b16 %v505, %v504
      %v626 = vpack.c.b16 %v507, %v506
      %v627 = vpack.c.b16 %v509, %v508
      %v628 = vpack.c.b16 %v511, %v510
      %v629 = vpack.c.b16 %v513, %v512
      %v630 = vpack.c.b16 %v515, %v514
      %v631 = vpack.c.b16 %v517, %v516
      %v632 = vpack.c.b16 %v519, %v518
      %v633 = vpack.c.b16 %v521, %v520
      %v634 = vpack.c.b16 %v523, %v522
      %v635 = vpack.c.b16 %v525, %v524
      %v636 = vpack.c.b16 %v527, %v526
      %v637 = vpack.c.b16 %v529, %v528
      %v638 = vpack.c.b16 %v531, %v530
      %v639 = vpack.c.b16 %v533, %v532
      %v640 = vpack.c.b16 %v535, %v534
      %v641 = vpack.c.b16 %v537, %v536
      %v642 = vpack.c.b16 %v539, %v538
      %v643 = vpack.c.b16 %v541, %v540
      %v644 = vpack.c.b16 %v543, %v542
      %v645 = vpack.c.b16 %v545, %v544
      %v646 = vpack.c.b16 %v547, %v546
      %v647 = vpack.c.b16 %v549, %v548
      %v648 = vpack.c.b16 %v551, %v550
      %v649 = vpack.c.b16 %v553, %v552
      %v650 = vpack.c.b16 %v555, %v554
      %v651 = vpack.c.b16 %v557, %v556
      %v652 = vpack.c.b16 %v559, %v558
      %v653 = vpack.c.b16 %v561, %v560
      %v654 = vpack.c.b16 %v563, %v562
      %v655 = vpack.c.b16 %v565, %v564
      %v656 = vpack.c.b16 %v567, %v566
      %v657 = vpack.c.b16 %v569, %v568
      %v658 = vpack.c.b16 %v571, %v570
      %v659 = vpack.c.b16 %v573, %v572
      %v660 = vpack.c.b16 %v575, %v574
      %v661 = vpack.c.b16 %v577, %v576
      %v662 = vpack.c.b16 %v579, %v578
      %v663 = vpack.c.b16 %v581, %v580
      %v664 = vpack.c.b16 %v583, %v582
      %v665 = vpack.c.b16 %v585, %v584
      %v666 = vpack.c.b16 %v587, %v586
      %v667 = vpack.c.b16 %v589, %v588
      %v668 = vpack.c.b16 %v591, %v590
      %v669 = vpack.c.b16 %v593, %v592
      %v670 = vpack.c.b16 %v595, %v594
      %v671 = vpack.c.b16 %v597, %v596
      %v672 = vpack.c.b16 %v599, %v598
      %v673 = vpack.c.b16 %v601, %v600
      %v674 = vpack.c.b16 %v603, %v602
      %v675 = vpack.c.b16 %v605, %v604
      %v676 = vpack.c.b16 %v607, %v606
      %v677 = vpack.c.b16 %v609, %v608
      %v678 = vpack.c.b16 %v611, %v610
      %v679 = vpack.c.b16 %v613, %v612
      %v680 = vpack.c.b16 %v615, %v614
      %v681 = vpack.c.b16 %v617, %v616
      %v686 = vunpack.c.l.b16 %v354
      %v687 = vunpack.c.l.b16 %v355
      %v688 = vunpack.c.l.b16 %v356
      %v689 = vunpack.c.l.b16 %v357
      %v690 = vpack.c.b16 %v687, %v686
      %v691 = vpack.c.b16 %v689, %v688
      %vm693 = vcmask 220160
      %v695 = vsel %vm693, %v618, 0
      %v698 = vsel %vm693, %v619, 0
      %v701 = vsel %vm693, %v620, 0
      %v704 = vsel %vm693, %v621, 0
      %v707 = vsel %vm693, %v622, 0
      %v710 = vsel %vm693, %v623, 0
      %v713 = vsel %vm693, %v624, 0
      %v716 = vsel %vm693, %v625, 0
      %v719 = vsel %vm693, %v626, 0
      %v722 = vsel %vm693, %v627, 0
      %v725 = vsel %vm693, %v628, 0
      %v728 = vsel %vm693, %v629, 0
      %v731 = vsel %vm693, %v630, 0
      %v734 = vsel %vm693, %v631, 0
      %v737 = vsel %vm693, %v632, 0
      %v740 = vsel %vm693, %v633, 0
      %v743 = vsel %vm693, %v634, 0
      %v746 = vsel %vm693, %v635, 0
      %v749 = vsel %vm693, %v636, 0
      %v752 = vsel %vm693, %v637, 0
      %v755 = vsel %vm693, %v638, 0
      %v758 = vsel %vm693, %v639, 0
      %v761 = vsel %vm693, %v640, 0
      %v764 = vsel %vm693, %v641, 0
      %v767 = vsel %vm693, %v642, 0
      %v770 = vsel %vm693, %v643, 0
      %v773 = vsel %vm693, %v644, 0
      %v776 = vsel %vm693, %v645, 0
      %v779 = vsel %vm693, %v646, 0
      %v782 = vsel %vm693, %v647, 0
      %v785 = vsel %vm693, %v648, 0
      %v788 = vsel %vm693, %v649, 0
      %v791 = vsel %vm693, %v650, 0
      %v794 = vsel %vm693, %v651, 0
      %v797 = vsel %vm693, %v652, 0
      %v800 = vsel %vm693, %v653, 0
      %v803 = vsel %vm693, %v654, 0
      %v806 = vsel %vm693, %v655, 0
      %v809 = vsel %vm693, %v656, 0
      %v812 = vsel %vm693, %v657, 0
      %v815 = vsel %vm693, %v658, 0
      %v818 = vsel %vm693, %v659, 0
      %v821 = vsel %vm693, %v660, 0
      %v824 = vsel %vm693, %v661, 0
      %v827 = vsel %vm693, %v662, 0
      %v830 = vsel %vm693, %v663, 0
      %v833 = vsel %vm693, %v664, 0
      %v836 = vsel %vm693, %v665, 0
      %v839 = vsel %vm693, %v666, 0
      %v842 = vsel %vm693, %v667, 0
      %v845 = vsel %vm693, %v668, 0
      %v848 = vsel %vm693, %v669, 0
      %v851 = vsel %vm693, %v670, 0
      %v854 = vsel %vm693, %v671, 0
      %v857 = vsel %vm693, %v672, 0
      %v860 = vsel %vm693, %v673, 0
      %v863 = vsel %vm693, %v674, 0
      %v866 = vsel %vm693, %v675, 0
      %v869 = vsel %vm693, %v676, 0
      %v872 = vsel %vm693, %v677, 0
      %v875 = vsel %vm693, %v678, 0
      %v878 = vsel %vm693, %v679, 0
      %v881 = vsel %vm693, %v680, 0
      %v884 = vsel %vm693, %v681, 0
      %vm886 = vcmask 1044480
      %vm887 = vcmask 1045504
      %v888 = vsel %vm886, 4294967295, 65535
      %v889 = vsel %vm887, %v888, 0
      %v891 = vand.u32 %v691, %v889
      %893 = vmatpush.bf16.msra.mxu0 0
      %894 = vmatpush.bf16.msra.mxu0 0
      %895 = vmatpush.bf16.msra.mxu0 0
      %896 = vmatpush.bf16.msra.mxu0 0
      %897 = vmatpush.bf16.msra.mxu0 0
      %898 = vmatpush.bf16.msra.mxu0 0
      %899 = vmatpush.bf16.msra.mxu0 %v891
      %900 = vmatpush.bf16.msra.mxu0 %v690
      %901 = vmatmul.bf16.gmra.mxu0 %v695
      %v902 = vpop.f32.mrf.mxu0
      %v903 = vadd.f32 %v360, %v902
      %v904 = vpop.f32.mrf.mxu0
      %v905 = vadd.f32 %v360, %v904
      %906 = vmatmul.bf16.gmra.mxu0 %v698
      %v907 = vpop.f32.mrf.mxu0
      %v908 = vadd.f32 %v360, %v907
      %v909 = vpop.f32.mrf.mxu0
      %v910 = vadd.f32 %v360, %v909
      %911 = vmatmul.bf16.gmra.mxu0 %v701
      %v912 = vpop.f32.mrf.mxu0
      %v913 = vadd.f32 %v360, %v912
      %v914 = vpop.f32.mrf.mxu0
      %v915 = vadd.f32 %v360, %v914
      %916 = vmatmul.bf16.gmra.mxu0 %v704
      %v917 = vpop.f32.mrf.mxu0
      %v918 = vadd.f32 %v360, %v917
      %v919 = vpop.f32.mrf.mxu0
      %v920 = vadd.f32 %v360, %v919
      %921 = vmatmul.bf16.gmra.mxu0 %v707
      %v922 = vpop.f32.mrf.mxu0
      %v923 = vadd.f32 %v360, %v922
      %v924 = vpop.f32.mrf.mxu0
      %v925 = vadd.f32 %v360, %v924
      %926 = vmatmul.bf16.gmra.mxu0 %v710
      %v927 = vpop.f32.mrf.mxu0
      %v928 = vadd.f32 %v360, %v927
      %v929 = vpop.f32.mrf.mxu0
      %v930 = vadd.f32 %v360, %v929
      %931 = vmatmul.bf16.gmra.mxu0 %v713
      %v932 = vpop.f32.mrf.mxu0
      %v933 = vadd.f32 %v360, %v932
      %v934 = vpop.f32.mrf.mxu0
      %v935 = vadd.f32 %v360, %v934
      %936 = vmatmul.bf16.gmra.mxu0 %v716
      %v937 = vpop.f32.mrf.mxu0
      %v938 = vadd.f32 %v360, %v937
      %v939 = vpop.f32.mrf.mxu0
      %v940 = vadd.f32 %v360, %v939
      %941 = vmatmul.bf16.gmra.mxu0 %v719
      %v942 = vpop.f32.mrf.mxu0
      %v943 = vadd.f32 %v360, %v942
      %v944 = vpop.f32.mrf.mxu0
      %v945 = vadd.f32 %v360, %v944
      %946 = vmatmul.bf16.gmra.mxu0 %v722
      %v947 = vpop.f32.mrf.mxu0
      %v948 = vadd.f32 %v360, %v947
      %v949 = vpop.f32.mrf.mxu0
      %v950 = vadd.f32 %v360, %v949
      %951 = vmatmul.bf16.gmra.mxu0 %v725
      %v952 = vpop.f32.mrf.mxu0
      %v953 = vadd.f32 %v360, %v952
      %v954 = vpop.f32.mrf.mxu0
      %v955 = vadd.f32 %v360, %v954
      %956 = vmatmul.bf16.gmra.mxu0 %v728
      %v957 = vpop.f32.mrf.mxu0
      %v958 = vadd.f32 %v360, %v957
      %v959 = vpop.f32.mrf.mxu0
      %v960 = vadd.f32 %v360, %v959
      %961 = vmatmul.bf16.gmra.mxu0 %v731
      %v962 = vpop.f32.mrf.mxu0
      %v963 = vadd.f32 %v360, %v962
      %v964 = vpop.f32.mrf.mxu0
      %v965 = vadd.f32 %v360, %v964
      %966 = vmatmul.bf16.gmra.mxu0 %v734
      %v967 = vpop.f32.mrf.mxu0
      %v968 = vadd.f32 %v360, %v967
      %v969 = vpop.f32.mrf.mxu0
      %v970 = vadd.f32 %v360, %v969
      %971 = vmatmul.bf16.gmra.mxu0 %v737
      %v972 = vpop.f32.mrf.mxu0
      %v973 = vadd.f32 %v360, %v972
      %v974 = vpop.f32.mrf.mxu0
      %v975 = vadd.f32 %v360, %v974
      %976 = vmatmul.bf16.gmra.mxu0 %v740
      %v977 = vpop.f32.mrf.mxu0
      %v978 = vadd.f32 %v360, %v977
      %v979 = vpop.f32.mrf.mxu0
      %v980 = vadd.f32 %v360, %v979
      %981 = vmatmul.bf16.gmra.mxu0 %v743
      %v982 = vpop.f32.mrf.mxu0
      %v983 = vadd.f32 %v360, %v982
      %v984 = vpop.f32.mrf.mxu0
      %v985 = vadd.f32 %v360, %v984
      %986 = vmatmul.bf16.gmra.mxu0 %v746
      %v987 = vpop.f32.mrf.mxu0
      %v988 = vadd.f32 %v360, %v987
      %v989 = vpop.f32.mrf.mxu0
      %v990 = vadd.f32 %v360, %v989
      %991 = vmatmul.bf16.gmra.mxu0 %v749
      %v992 = vpop.f32.mrf.mxu0
      %v993 = vadd.f32 %v360, %v992
      %v994 = vpop.f32.mrf.mxu0
      %v995 = vadd.f32 %v360, %v994
      %996 = vmatmul.bf16.gmra.mxu0 %v752
      %v997 = vpop.f32.mrf.mxu0
      %v998 = vadd.f32 %v360, %v997
      %v999 = vpop.f32.mrf.mxu0
      %v1000 = vadd.f32 %v360, %v999
      %1001 = vmatmul.bf16.gmra.mxu0 %v755
      %v1002 = vpop.f32.mrf.mxu0
      %v1003 = vadd.f32 %v360, %v1002
      %v1004 = vpop.f32.mrf.mxu0
      %v1005 = vadd.f32 %v360, %v1004
      %1006 = vmatmul.bf16.gmra.mxu0 %v758
      %v1007 = vpop.f32.mrf.mxu0
      %v1008 = vadd.f32 %v360, %v1007
      %v1009 = vpop.f32.mrf.mxu0
      %v1010 = vadd.f32 %v360, %v1009
      %1011 = vmatmul.bf16.gmra.mxu0 %v761
      %v1012 = vpop.f32.mrf.mxu0
      %v1013 = vadd.f32 %v360, %v1012
      %v1014 = vpop.f32.mrf.mxu0
      %v1015 = vadd.f32 %v360, %v1014
      %1016 = vmatmul.bf16.gmra.mxu0 %v764
      %v1017 = vpop.f32.mrf.mxu0
      %v1018 = vadd.f32 %v360, %v1017
      %v1019 = vpop.f32.mrf.mxu0
      %v1020 = vadd.f32 %v360, %v1019
      %1021 = vmatmul.bf16.gmra.mxu0 %v767
      %v1022 = vpop.f32.mrf.mxu0
      %v1023 = vadd.f32 %v360, %v1022
      %v1024 = vpop.f32.mrf.mxu0
      %v1025 = vadd.f32 %v360, %v1024
      %1026 = vmatmul.bf16.gmra.mxu0 %v770
      %v1027 = vpop.f32.mrf.mxu0
      %v1028 = vadd.f32 %v360, %v1027
      %v1029 = vpop.f32.mrf.mxu0
      %v1030 = vadd.f32 %v360, %v1029
      %1031 = vmatmul.bf16.gmra.mxu0 %v773
      %v1032 = vpop.f32.mrf.mxu0
      %v1033 = vadd.f32 %v360, %v1032
      %v1034 = vpop.f32.mrf.mxu0
      %v1035 = vadd.f32 %v360, %v1034
      %1036 = vmatmul.bf16.gmra.mxu0 %v776
      %v1037 = vpop.f32.mrf.mxu0
      %v1038 = vadd.f32 %v360, %v1037
      %v1039 = vpop.f32.mrf.mxu0
      %v1040 = vadd.f32 %v360, %v1039
      %1041 = vmatmul.bf16.gmra.mxu0 %v779
      %v1042 = vpop.f32.mrf.mxu0
      %v1043 = vadd.f32 %v360, %v1042
      %v1044 = vpop.f32.mrf.mxu0
      %v1045 = vadd.f32 %v360, %v1044
      %1046 = vmatmul.bf16.gmra.mxu0 %v782
      %v1047 = vpop.f32.mrf.mxu0
      %v1048 = vadd.f32 %v360, %v1047
      %v1049 = vpop.f32.mrf.mxu0
      %v1050 = vadd.f32 %v360, %v1049
      %1051 = vmatmul.bf16.gmra.mxu0 %v785
      %v1052 = vpop.f32.mrf.mxu0
      %v1053 = vadd.f32 %v360, %v1052
      %v1054 = vpop.f32.mrf.mxu0
      %v1055 = vadd.f32 %v360, %v1054
      %1056 = vmatmul.bf16.gmra.mxu0 %v788
      %v1057 = vpop.f32.mrf.mxu0
      %v1058 = vadd.f32 %v360, %v1057
      %v1059 = vpop.f32.mrf.mxu0
      %v1060 = vadd.f32 %v360, %v1059
      %1061 = vmatmul.bf16.gmra.mxu0 %v791
      %v1062 = vpop.f32.mrf.mxu0
      %v1063 = vadd.f32 %v360, %v1062
      %v1064 = vpop.f32.mrf.mxu0
      %v1065 = vadd.f32 %v360, %v1064
      %1066 = vmatmul.bf16.gmra.mxu0 %v794
      %v1067 = vpop.f32.mrf.mxu0
      %v1068 = vadd.f32 %v360, %v1067
      %v1069 = vpop.f32.mrf.mxu0
      %v1070 = vadd.f32 %v360, %v1069
      %1071 = vmatmul.bf16.gmra.mxu0 %v797
      %v1072 = vpop.f32.mrf.mxu0
      %v1073 = vadd.f32 %v360, %v1072
      %v1074 = vpop.f32.mrf.mxu0
      %v1075 = vadd.f32 %v360, %v1074
      %1076 = vmatmul.bf16.gmra.mxu0 %v800
      %v1077 = vpop.f32.mrf.mxu0
      %v1078 = vadd.f32 %v360, %v1077
      %v1079 = vpop.f32.mrf.mxu0
      %v1080 = vadd.f32 %v360, %v1079
      %1081 = vmatmul.bf16.gmra.mxu0 %v803
      %v1082 = vpop.f32.mrf.mxu0
      %v1083 = vadd.f32 %v360, %v1082
      %v1084 = vpop.f32.mrf.mxu0
      %v1085 = vadd.f32 %v360, %v1084
      %1086 = vmatmul.bf16.gmra.mxu0 %v806
      %v1087 = vpop.f32.mrf.mxu0
      %v1088 = vadd.f32 %v360, %v1087
      %v1089 = vpop.f32.mrf.mxu0
      %v1090 = vadd.f32 %v360, %v1089
      %1091 = vmatmul.bf16.gmra.mxu0 %v809
      %v1092 = vpop.f32.mrf.mxu0
      %v1093 = vadd.f32 %v360, %v1092
      %v1094 = vpop.f32.mrf.mxu0
      %v1095 = vadd.f32 %v360, %v1094
      %1096 = vmatmul.bf16.gmra.mxu0 %v812
      %v1097 = vpop.f32.mrf.mxu0
      %v1098 = vadd.f32 %v360, %v1097
      %v1099 = vpop.f32.mrf.mxu0
      %v1100 = vadd.f32 %v360, %v1099
      %1101 = vmatmul.bf16.gmra.mxu0 %v815
      %v1102 = vpop.f32.mrf.mxu0
      %v1103 = vadd.f32 %v360, %v1102
      %v1104 = vpop.f32.mrf.mxu0
      %v1105 = vadd.f32 %v360, %v1104
      %1106 = vmatmul.bf16.gmra.mxu0 %v818
      %v1107 = vpop.f32.mrf.mxu0
      %v1108 = vadd.f32 %v360, %v1107
      %v1109 = vpop.f32.mrf.mxu0
      %v1110 = vadd.f32 %v360, %v1109
      %1111 = vmatmul.bf16.gmra.mxu0 %v821
      %v1112 = vpop.f32.mrf.mxu0
      %v1113 = vadd.f32 %v360, %v1112
      %v1114 = vpop.f32.mrf.mxu0
      %v1115 = vadd.f32 %v360, %v1114
      %1116 = vmatmul.bf16.gmra.mxu0 %v824
      %v1117 = vpop.f32.mrf.mxu0
      %v1118 = vadd.f32 %v360, %v1117
      %v1119 = vpop.f32.mrf.mxu0
      %v1120 = vadd.f32 %v360, %v1119
      %1121 = vmatmul.bf16.gmra.mxu0 %v827
      %v1122 = vpop.f32.mrf.mxu0
      %v1123 = vadd.f32 %v360, %v1122
      %v1124 = vpop.f32.mrf.mxu0
      %v1125 = vadd.f32 %v360, %v1124
      %1126 = vmatmul.bf16.gmra.mxu0 %v830
      %v1127 = vpop.f32.mrf.mxu0
      %v1128 = vadd.f32 %v360, %v1127
      %v1129 = vpop.f32.mrf.mxu0
      %v1130 = vadd.f32 %v360, %v1129
      %1131 = vmatmul.bf16.gmra.mxu0 %v833
      %v1132 = vpop.f32.mrf.mxu0
      %v1133 = vadd.f32 %v360, %v1132
      %v1134 = vpop.f32.mrf.mxu0
      %v1135 = vadd.f32 %v360, %v1134
      %1136 = vmatmul.bf16.gmra.mxu0 %v836
      %v1137 = vpop.f32.mrf.mxu0
      %v1138 = vadd.f32 %v360, %v1137
      %v1139 = vpop.f32.mrf.mxu0
      %v1140 = vadd.f32 %v360, %v1139
      %1141 = vmatmul.bf16.gmra.mxu0 %v839
      %v1142 = vpop.f32.mrf.mxu0
      %v1143 = vadd.f32 %v360, %v1142
      %v1144 = vpop.f32.mrf.mxu0
      %v1145 = vadd.f32 %v360, %v1144
      %1146 = vmatmul.bf16.gmra.mxu0 %v842
      %v1147 = vpop.f32.mrf.mxu0
      %v1148 = vadd.f32 %v360, %v1147
      %v1149 = vpop.f32.mrf.mxu0
      %v1150 = vadd.f32 %v360, %v1149
      %1151 = vmatmul.bf16.gmra.mxu0 %v845
      %v1152 = vpop.f32.mrf.mxu0
      %v1153 = vadd.f32 %v360, %v1152
      %v1154 = vpop.f32.mrf.mxu0
      %v1155 = vadd.f32 %v360, %v1154
      %1156 = vmatmul.bf16.gmra.mxu0 %v848
      %v1157 = vpop.f32.mrf.mxu0
      %v1158 = vadd.f32 %v360, %v1157
      %v1159 = vpop.f32.mrf.mxu0
      %v1160 = vadd.f32 %v360, %v1159
      %1161 = vmatmul.bf16.gmra.mxu0 %v851
      %v1162 = vpop.f32.mrf.mxu0
      %v1163 = vadd.f32 %v360, %v1162
      %v1164 = vpop.f32.mrf.mxu0
      %v1165 = vadd.f32 %v360, %v1164
      %1166 = vmatmul.bf16.gmra.mxu0 %v854
      %v1167 = vpop.f32.mrf.mxu0
      %v1168 = vadd.f32 %v360, %v1167
      %v1169 = vpop.f32.mrf.mxu0
      %v1170 = vadd.f32 %v360, %v1169
      %1171 = vmatmul.bf16.gmra.mxu0 %v857
      %v1172 = vpop.f32.mrf.mxu0
      %v1173 = vadd.f32 %v360, %v1172
      %v1174 = vpop.f32.mrf.mxu0
      %v1175 = vadd.f32 %v360, %v1174
      %1176 = vmatmul.bf16.gmra.mxu0 %v860
      %v1177 = vpop.f32.mrf.mxu0
      %v1178 = vadd.f32 %v360, %v1177
      %v1179 = vpop.f32.mrf.mxu0
      %v1180 = vadd.f32 %v360, %v1179
      %1181 = vmatmul.bf16.gmra.mxu0 %v863
      %v1182 = vpop.f32.mrf.mxu0
      %v1183 = vadd.f32 %v360, %v1182
      %v1184 = vpop.f32.mrf.mxu0
      %v1185 = vadd.f32 %v360, %v1184
      %1186 = vmatmul.bf16.gmra.mxu0 %v866
      %v1187 = vpop.f32.mrf.mxu0
      %v1188 = vadd.f32 %v360, %v1187
      %v1189 = vpop.f32.mrf.mxu0
      %v1190 = vadd.f32 %v360, %v1189
      %1191 = vmatmul.bf16.gmra.mxu0 %v869
      %v1192 = vpop.f32.mrf.mxu0
      %v1193 = vadd.f32 %v360, %v1192
      %v1194 = vpop.f32.mrf.mxu0
      %v1195 = vadd.f32 %v360, %v1194
      %1196 = vmatmul.bf16.gmra.mxu0 %v872
      %v1197 = vpop.f32.mrf.mxu0
      %v1198 = vadd.f32 %v360, %v1197
      %v1199 = vpop.f32.mrf.mxu0
      %v1200 = vadd.f32 %v360, %v1199
      %1201 = vmatmul.bf16.gmra.mxu0 %v875
      %v1202 = vpop.f32.mrf.mxu0
      %v1203 = vadd.f32 %v360, %v1202
      %v1204 = vpop.f32.mrf.mxu0
      %v1205 = vadd.f32 %v360, %v1204
      %1206 = vmatmul.bf16.gmra.mxu0 %v878
      %v1207 = vpop.f32.mrf.mxu0
      %v1208 = vadd.f32 %v360, %v1207
      %v1209 = vpop.f32.mrf.mxu0
      %v1210 = vadd.f32 %v360, %v1209
      %1211 = vmatmul.bf16.gmra.mxu0 %v881
      %v1212 = vpop.f32.mrf.mxu0
      %v1213 = vadd.f32 %v360, %v1212
      %v1214 = vpop.f32.mrf.mxu0
      %v1215 = vadd.f32 %v360, %v1214
      %1216 = vmatmul.bf16.gmra.mxu0 %v884
      %v1217 = vpop.f32.mrf.mxu0
      %v1218 = vadd.f32 %v360, %v1217
      %v1219 = vpop.f32.mrf.mxu0
      %v1220 = vadd.f32 %v360, %v1219
      %1221 = vdwg.mxu0
      %v1222 = vmax.f32 %v903, 0.0
      %v1223 = vmax.f32 %v905, 0.0
      %v1224 = vmax.f32 %v908, 0.0
      %v1225 = vmax.f32 %v910, 0.0
      %v1226 = vmax.f32 %v913, 0.0
      %v1227 = vmax.f32 %v915, 0.0
      %v1228 = vmax.f32 %v918, 0.0
      %v1229 = vmax.f32 %v920, 0.0
      %v1230 = vmax.f32 %v923, 0.0
      %v1231 = vmax.f32 %v925, 0.0
      %v1232 = vmax.f32 %v928, 0.0
      %v1233 = vmax.f32 %v930, 0.0
      %v1234 = vmax.f32 %v933, 0.0
      %v1235 = vmax.f32 %v935, 0.0
      %v1236 = vmax.f32 %v938, 0.0
      %v1237 = vmax.f32 %v940, 0.0
      %v1238 = vmax.f32 %v943, 0.0
      %v1239 = vmax.f32 %v945, 0.0
      %v1240 = vmax.f32 %v948, 0.0
      %v1241 = vmax.f32 %v950, 0.0
      %v1242 = vmax.f32 %v953, 0.0
      %v1243 = vmax.f32 %v955, 0.0
      %v1244 = vmax.f32 %v958, 0.0
      %v1245 = vmax.f32 %v960, 0.0
      %v1246 = vmax.f32 %v963, 0.0
      %v1247 = vmax.f32 %v965, 0.0
      %v1248 = vmax.f32 %v968, 0.0
      %v1249 = vmax.f32 %v970, 0.0
      %v1250 = vmax.f32 %v973, 0.0
      %v1251 = vmax.f32 %v975, 0.0
      %v1252 = vmax.f32 %v978, 0.0
      %v1253 = vmax.f32 %v980, 0.0
      %v1254 = vmax.f32 %v983, 0.0
      %v1255 = vmax.f32 %v985, 0.0
      %v1256 = vmax.f32 %v988, 0.0
      %v1257 = vmax.f32 %v990, 0.0
      %v1258 = vmax.f32 %v993, 0.0
      %v1259 = vmax.f32 %v995, 0.0
      %v1260 = vmax.f32 %v998, 0.0
      %v1261 = vmax.f32 %v1000, 0.0
      %v1262 = vmax.f32 %v1003, 0.0
      %v1263 = vmax.f32 %v1005, 0.0
      %v1264 = vmax.f32 %v1008, 0.0
      %v1265 = vmax.f32 %v1010, 0.0
      %v1266 = vmax.f32 %v1013, 0.0
      %v1267 = vmax.f32 %v1015, 0.0
      %v1268 = vmax.f32 %v1018, 0.0
      %v1269 = vmax.f32 %v1020, 0.0
      %v1270 = vmax.f32 %v1023, 0.0
      %v1271 = vmax.f32 %v1025, 0.0
      %v1272 = vmax.f32 %v1028, 0.0
      %v1273 = vmax.f32 %v1030, 0.0
      %v1274 = vmax.f32 %v1033, 0.0
      %v1275 = vmax.f32 %v1035, 0.0
      %v1276 = vmax.f32 %v1038, 0.0
      %v1277 = vmax.f32 %v1040, 0.0
      %v1278 = vmax.f32 %v1043, 0.0
      %v1279 = vmax.f32 %v1045, 0.0
      %v1280 = vmax.f32 %v1048, 0.0
      %v1281 = vmax.f32 %v1050, 0.0
      %v1282 = vmax.f32 %v1053, 0.0
      %v1283 = vmax.f32 %v1055, 0.0
      %v1284 = vmax.f32 %v1058, 0.0
      %v1285 = vmax.f32 %v1060, 0.0
      %v1286 = vmax.f32 %v1063, 0.0
      %v1287 = vmax.f32 %v1065, 0.0
      %v1288 = vmax.f32 %v1068, 0.0
      %v1289 = vmax.f32 %v1070, 0.0
      %v1290 = vmax.f32 %v1073, 0.0
      %v1291 = vmax.f32 %v1075, 0.0
      %v1292 = vmax.f32 %v1078, 0.0
      %v1293 = vmax.f32 %v1080, 0.0
      %v1294 = vmax.f32 %v1083, 0.0
      %v1295 = vmax.f32 %v1085, 0.0
      %v1296 = vmax.f32 %v1088, 0.0
      %v1297 = vmax.f32 %v1090, 0.0
      %v1298 = vmax.f32 %v1093, 0.0
      %v1299 = vmax.f32 %v1095, 0.0
      %v1300 = vmax.f32 %v1098, 0.0
      %v1301 = vmax.f32 %v1100, 0.0
      %v1302 = vmax.f32 %v1103, 0.0
      %v1303 = vmax.f32 %v1105, 0.0
      %v1304 = vmax.f32 %v1108, 0.0
      %v1305 = vmax.f32 %v1110, 0.0
      %v1306 = vmax.f32 %v1113, 0.0
      %v1307 = vmax.f32 %v1115, 0.0
      %v1308 = vmax.f32 %v1118, 0.0
      %v1309 = vmax.f32 %v1120, 0.0
      %v1310 = vmax.f32 %v1123, 0.0
      %v1311 = vmax.f32 %v1125, 0.0
      %v1312 = vmax.f32 %v1128, 0.0
      %v1313 = vmax.f32 %v1130, 0.0
      %v1314 = vmax.f32 %v1133, 0.0
      %v1315 = vmax.f32 %v1135, 0.0
      %v1316 = vmax.f32 %v1138, 0.0
      %v1317 = vmax.f32 %v1140, 0.0
      %v1318 = vmax.f32 %v1143, 0.0
      %v1319 = vmax.f32 %v1145, 0.0
      %v1320 = vmax.f32 %v1148, 0.0
      %v1321 = vmax.f32 %v1150, 0.0
      %v1322 = vmax.f32 %v1153, 0.0
      %v1323 = vmax.f32 %v1155, 0.0
      %v1324 = vmax.f32 %v1158, 0.0
      %v1325 = vmax.f32 %v1160, 0.0
      %v1326 = vmax.f32 %v1163, 0.0
      %v1327 = vmax.f32 %v1165, 0.0
      %v1328 = vmax.f32 %v1168, 0.0
      %v1329 = vmax.f32 %v1170, 0.0
      %v1330 = vmax.f32 %v1173, 0.0
      %v1331 = vmax.f32 %v1175, 0.0
      %v1332 = vmax.f32 %v1178, 0.0
      %v1333 = vmax.f32 %v1180, 0.0
      %v1334 = vmax.f32 %v1183, 0.0
      %v1335 = vmax.f32 %v1185, 0.0
      %v1336 = vmax.f32 %v1188, 0.0
      %v1337 = vmax.f32 %v1190, 0.0
      %v1338 = vmax.f32 %v1193, 0.0
      %v1339 = vmax.f32 %v1195, 0.0
      %v1340 = vmax.f32 %v1198, 0.0
      %v1341 = vmax.f32 %v1200, 0.0
      %v1342 = vmax.f32 %v1203, 0.0
      %v1343 = vmax.f32 %v1205, 0.0
      %v1344 = vmax.f32 %v1208, 0.0
      %v1345 = vmax.f32 %v1210, 0.0
      %v1346 = vmax.f32 %v1213, 0.0
      %v1347 = vmax.f32 %v1215, 0.0
      %v1348 = vmax.f32 %v1218, 0.0
      %v1349 = vmax.f32 %v1220, 0.0
      %v1350 = vpack.c.bf16 %v1222, %v1222
      %v1351 = vpack.c.bf16 %v1223, %v1223
      %v1352 = vpack.c.bf16 %v1224, %v1224
      %v1353 = vpack.c.bf16 %v1225, %v1225
      %v1354 = vpack.c.bf16 %v1226, %v1226
      %v1355 = vpack.c.bf16 %v1227, %v1227
      %v1356 = vpack.c.bf16 %v1228, %v1228
      %v1357 = vpack.c.bf16 %v1229, %v1229
      %v1358 = vpack.c.bf16 %v1230, %v1230
      %v1359 = vpack.c.bf16 %v1231, %v1231
      %v1360 = vpack.c.bf16 %v1232, %v1232
      %v1361 = vpack.c.bf16 %v1233, %v1233
      %v1362 = vpack.c.bf16 %v1234, %v1234
      %v1363 = vpack.c.bf16 %v1235, %v1235
      %v1364 = vpack.c.bf16 %v1236, %v1236
      %v1365 = vpack.c.bf16 %v1237, %v1237
      %v1366 = vpack.c.bf16 %v1238, %v1238
      %v1367 = vpack.c.bf16 %v1239, %v1239
      %v1368 = vpack.c.bf16 %v1240, %v1240
      %v1369 = vpack.c.bf16 %v1241, %v1241
      %v1370 = vpack.c.bf16 %v1242, %v1242
      %v1371 = vpack.c.bf16 %v1243, %v1243
      %v1372 = vpack.c.bf16 %v1244, %v1244
      %v1373 = vpack.c.bf16 %v1245, %v1245
      %v1374 = vpack.c.bf16 %v1246, %v1246
      %v1375 = vpack.c.bf16 %v1247, %v1247
      %v1376 = vpack.c.bf16 %v1248, %v1248
      %v1377 = vpack.c.bf16 %v1249, %v1249
      %v1378 = vpack.c.bf16 %v1250, %v1250
      %v1379 = vpack.c.bf16 %v1251, %v1251
      %v1380 = vpack.c.bf16 %v1252, %v1252
      %v1381 = vpack.c.bf16 %v1253, %v1253
      %v1382 = vpack.c.bf16 %v1254, %v1254
      %v1383 = vpack.c.bf16 %v1255, %v1255
      %v1384 = vpack.c.bf16 %v1256, %v1256
      %v1385 = vpack.c.bf16 %v1257, %v1257
      %v1386 = vpack.c.bf16 %v1258, %v1258
      %v1387 = vpack.c.bf16 %v1259, %v1259
      %v1388 = vpack.c.bf16 %v1260, %v1260
      %v1389 = vpack.c.bf16 %v1261, %v1261
      %v1390 = vpack.c.bf16 %v1262, %v1262
      %v1391 = vpack.c.bf16 %v1263, %v1263
      %v1392 = vpack.c.bf16 %v1264, %v1264
      %v1393 = vpack.c.bf16 %v1265, %v1265
      %v1394 = vpack.c.bf16 %v1266, %v1266
      %v1395 = vpack.c.bf16 %v1267, %v1267
      %v1396 = vpack.c.bf16 %v1268, %v1268
      %v1397 = vpack.c.bf16 %v1269, %v1269
      %v1398 = vpack.c.bf16 %v1270, %v1270
      %v1399 = vpack.c.bf16 %v1271, %v1271
      %v1400 = vpack.c.bf16 %v1272, %v1272
      %v1401 = vpack.c.bf16 %v1273, %v1273
      %v1402 = vpack.c.bf16 %v1274, %v1274
      %v1403 = vpack.c.bf16 %v1275, %v1275
      %v1404 = vpack.c.bf16 %v1276, %v1276
      %v1405 = vpack.c.bf16 %v1277, %v1277
      %v1406 = vpack.c.bf16 %v1278, %v1278
      %v1407 = vpack.c.bf16 %v1279, %v1279
      %v1408 = vpack.c.bf16 %v1280, %v1280
      %v1409 = vpack.c.bf16 %v1281, %v1281
      %v1410 = vpack.c.bf16 %v1282, %v1282
      %v1411 = vpack.c.bf16 %v1283, %v1283
      %v1412 = vpack.c.bf16 %v1284, %v1284
      %v1413 = vpack.c.bf16 %v1285, %v1285
      %v1414 = vpack.c.bf16 %v1286, %v1286
      %v1415 = vpack.c.bf16 %v1287, %v1287
      %v1416 = vpack.c.bf16 %v1288, %v1288
      %v1417 = vpack.c.bf16 %v1289, %v1289
      %v1418 = vpack.c.bf16 %v1290, %v1290
      %v1419 = vpack.c.bf16 %v1291, %v1291
      %v1420 = vpack.c.bf16 %v1292, %v1292
      %v1421 = vpack.c.bf16 %v1293, %v1293
      %v1422 = vpack.c.bf16 %v1294, %v1294
      %v1423 = vpack.c.bf16 %v1295, %v1295
      %v1424 = vpack.c.bf16 %v1296, %v1296
      %v1425 = vpack.c.bf16 %v1297, %v1297
      %v1426 = vpack.c.bf16 %v1298, %v1298
      %v1427 = vpack.c.bf16 %v1299, %v1299
      %v1428 = vpack.c.bf16 %v1300, %v1300
      %v1429 = vpack.c.bf16 %v1301, %v1301
      %v1430 = vpack.c.bf16 %v1302, %v1302
      %v1431 = vpack.c.bf16 %v1303, %v1303
      %v1432 = vpack.c.bf16 %v1304, %v1304
      %v1433 = vpack.c.bf16 %v1305, %v1305
      %v1434 = vpack.c.bf16 %v1306, %v1306
      %v1435 = vpack.c.bf16 %v1307, %v1307
      %v1436 = vpack.c.bf16 %v1308, %v1308
      %v1437 = vpack.c.bf16 %v1309, %v1309
      %v1438 = vpack.c.bf16 %v1310, %v1310
      %v1439 = vpack.c.bf16 %v1311, %v1311
      %v1440 = vpack.c.bf16 %v1312, %v1312
      %v1441 = vpack.c.bf16 %v1313, %v1313
      %v1442 = vpack.c.bf16 %v1314, %v1314
      %v1443 = vpack.c.bf16 %v1315, %v1315
      %v1444 = vpack.c.bf16 %v1316, %v1316
      %v1445 = vpack.c.bf16 %v1317, %v1317
      %v1446 = vpack.c.bf16 %v1318, %v1318
      %v1447 = vpack.c.bf16 %v1319, %v1319
      %v1448 = vpack.c.bf16 %v1320, %v1320
      %v1449 = vpack.c.bf16 %v1321, %v1321
      %v1450 = vpack.c.bf16 %v1322, %v1322
      %v1451 = vpack.c.bf16 %v1323, %v1323
      %v1452 = vpack.c.bf16 %v1324, %v1324
      %v1453 = vpack.c.bf16 %v1325, %v1325
      %v1454 = vpack.c.bf16 %v1326, %v1326
      %v1455 = vpack.c.bf16 %v1327, %v1327
      %v1456 = vpack.c.bf16 %v1328, %v1328
      %v1457 = vpack.c.bf16 %v1329, %v1329
      %v1458 = vpack.c.bf16 %v1330, %v1330
      %v1459 = vpack.c.bf16 %v1331, %v1331
      %v1460 = vpack.c.bf16 %v1332, %v1332
      %v1461 = vpack.c.bf16 %v1333, %v1333
      %v1462 = vpack.c.bf16 %v1334, %v1334
      %v1463 = vpack.c.bf16 %v1335, %v1335
      %v1464 = vpack.c.bf16 %v1336, %v1336
      %v1465 = vpack.c.bf16 %v1337, %v1337
      %v1466 = vpack.c.bf16 %v1338, %v1338
      %v1467 = vpack.c.bf16 %v1339, %v1339
      %v1468 = vpack.c.bf16 %v1340, %v1340
      %v1469 = vpack.c.bf16 %v1341, %v1341
      %v1470 = vpack.c.bf16 %v1342, %v1342
      %v1471 = vpack.c.bf16 %v1343, %v1343
      %v1472 = vpack.c.bf16 %v1344, %v1344
      %v1473 = vpack.c.bf16 %v1345, %v1345
      %v1474 = vpack.c.bf16 %v1346, %v1346
      %v1475 = vpack.c.bf16 %v1347, %v1347
      %v1476 = vpack.c.bf16 %v1348, %v1348
      %v1477 = vpack.c.bf16 %v1349, %v1349
      %vm1478 = vcmask 519168
      %1479 = vst.msk [vmem:[%s223] sm:$0xf] %vm1478, %v1350
      %1480 = vst.msk [vmem:[%s223 + $0x4] sm:$0xf] %vm1478, %v1351
      %1481 = vst.msk [vmem:[%s223 + $0x8] sm:$0xf] %vm1478, %v1352
      %1482 = vst.msk [vmem:[%s223 + $0xc] sm:$0xf] %vm1478, %v1353
      %1483 = vst.msk [vmem:[%s223 + $0x10] sm:$0xf] %vm1478, %v1354
      %1484 = vst.msk [vmem:[%s223 + $0x14] sm:$0xf] %vm1478, %v1355
      %1485 = vst.msk [vmem:[%s223 + $0x18] sm:$0xf] %vm1478, %v1356
      %1486 = vst.msk [vmem:[%s223 + $0x1c] sm:$0xf] %vm1478, %v1357
      %1487 = vst.msk [vmem:[%s223 + $0x20] sm:$0xf] %vm1478, %v1358
      %1488 = vst.msk [vmem:[%s223 + $0x24] sm:$0xf] %vm1478, %v1359
      %1489 = vst.msk [vmem:[%s223 + $0x28] sm:$0xf] %vm1478, %v1360
      %1490 = vst.msk [vmem:[%s223 + $0x2c] sm:$0xf] %vm1478, %v1361
      %1491 = vst.msk [vmem:[%s223 + $0x30] sm:$0xf] %vm1478, %v1362
      %1492 = vst.msk [vmem:[%s223 + $0x34] sm:$0xf] %vm1478, %v1363
      %1493 = vst.msk [vmem:[%s223 + $0x38] sm:$0xf] %vm1478, %v1364
      %1494 = vst.msk [vmem:[%s223 + $0x3c] sm:$0xf] %vm1478, %v1365
      %1495 = vst.msk [vmem:[%s223 + $0x40] sm:$0xf] %vm1478, %v1366
      %1496 = vst.msk [vmem:[%s223 + $0x44] sm:$0xf] %vm1478, %v1367
      %1497 = vst.msk [vmem:[%s223 + $0x48] sm:$0xf] %vm1478, %v1368
      %1498 = vst.msk [vmem:[%s223 + $0x4c] sm:$0xf] %vm1478, %v1369
      %1499 = vst.msk [vmem:[%s223 + $0x50] sm:$0xf] %vm1478, %v1370
      %1500 = vst.msk [vmem:[%s223 + $0x54] sm:$0xf] %vm1478, %v1371
      %1501 = vst.msk [vmem:[%s223 + $0x58] sm:$0xf] %vm1478, %v1372
      %1502 = vst.msk [vmem:[%s223 + $0x5c] sm:$0xf] %vm1478, %v1373
      %1503 = vst.msk [vmem:[%s223 + $0x60] sm:$0xf] %vm1478, %v1374
      %1504 = vst.msk [vmem:[%s223 + $0x64] sm:$0xf] %vm1478, %v1375
      %1505 = vst.msk [vmem:[%s223 + $0x68] sm:$0xf] %vm1478, %v1376
      %1506 = vst.msk [vmem:[%s223 + $0x6c] sm:$0xf] %vm1478, %v1377
      %1507 = vst.msk [vmem:[%s223 + $0x70] sm:$0xf] %vm1478, %v1378
      %1508 = vst.msk [vmem:[%s223 + $0x74] sm:$0xf] %vm1478, %v1379
      %1509 = vst.msk [vmem:[%s223 + $0x78] sm:$0xf] %vm1478, %v1380
      %1510 = vst.msk [vmem:[%s223 + $0x7c] sm:$0xf] %vm1478, %v1381
      %1511 = vst.msk [vmem:[%s223 + $0x80] sm:$0xf] %vm1478, %v1382
      %1512 = vst.msk [vmem:[%s223 + $0x84] sm:$0xf] %vm1478, %v1383
      %1513 = vst.msk [vmem:[%s223 + $0x88] sm:$0xf] %vm1478, %v1384
      %1514 = vst.msk [vmem:[%s223 + $0x8c] sm:$0xf] %vm1478, %v1385
      %1515 = vst.msk [vmem:[%s223 + $0x90] sm:$0xf] %vm1478, %v1386
      %1516 = vst.msk [vmem:[%s223 + $0x94] sm:$0xf] %vm1478, %v1387
      %1517 = vst.msk [vmem:[%s223 + $0x98] sm:$0xf] %vm1478, %v1388
      %1518 = vst.msk [vmem:[%s223 + $0x9c] sm:$0xf] %vm1478, %v1389
      %1519 = vst.msk [vmem:[%s223 + $0xa0] sm:$0xf] %vm1478, %v1390
      %1520 = vst.msk [vmem:[%s223 + $0xa4] sm:$0xf] %vm1478, %v1391
      %1521 = vst.msk [vmem:[%s223 + $0xa8] sm:$0xf] %vm1478, %v1392
      %1522 = vst.msk [vmem:[%s223 + $0xac] sm:$0xf] %vm1478, %v1393
      %1523 = vst.msk [vmem:[%s223 + $0xb0] sm:$0xf] %vm1478, %v1394
      %1524 = vst.msk [vmem:[%s223 + $0xb4] sm:$0xf] %vm1478, %v1395
      %1525 = vst.msk [vmem:[%s223 + $0xb8] sm:$0xf] %vm1478, %v1396
      %1526 = vst.msk [vmem:[%s223 + $0xbc] sm:$0xf] %vm1478, %v1397
      %1527 = vst.msk [vmem:[%s223 + $0xc0] sm:$0xf] %vm1478, %v1398
      %1528 = vst.msk [vmem:[%s223 + $0xc4] sm:$0xf] %vm1478, %v1399
      %1529 = vst.msk [vmem:[%s223 + $0xc8] sm:$0xf] %vm1478, %v1400
      %1530 = vst.msk [vmem:[%s223 + $0xcc] sm:$0xf] %vm1478, %v1401
      %1531 = vst.msk [vmem:[%s223 + $0xd0] sm:$0xf] %vm1478, %v1402
      %1532 = vst.msk [vmem:[%s223 + $0xd4] sm:$0xf] %vm1478, %v1403
      %1533 = vst.msk [vmem:[%s223 + $0xd8] sm:$0xf] %vm1478, %v1404
      %1534 = vst.msk [vmem:[%s223 + $0xdc] sm:$0xf] %vm1478, %v1405
      %1535 = vst.msk [vmem:[%s223 + $0xe0] sm:$0xf] %vm1478, %v1406
      %1536 = vst.msk [vmem:[%s223 + $0xe4] sm:$0xf] %vm1478, %v1407
      %1537 = vst.msk [vmem:[%s223 + $0xe8] sm:$0xf] %vm1478, %v1408
      %1538 = vst.msk [vmem:[%s223 + $0xec] sm:$0xf] %vm1478, %v1409
      %1539 = vst.msk [vmem:[%s223 + $0xf0] sm:$0xf] %vm1478, %v1410
      %1540 = vst.msk [vmem:[%s223 + $0xf4] sm:$0xf] %vm1478, %v1411
      %1541 = vst.msk [vmem:[%s223 + $0xf8] sm:$0xf] %vm1478, %v1412
      %1542 = vst.msk [vmem:[%s223 + $0xfc] sm:$0xf] %vm1478, %v1413
      %1543 = vst.msk [vmem:[%s223 + $0x100] sm:$0xf] %vm1478, %v1414
      %1544 = vst.msk [vmem:[%s223 + $0x104] sm:$0xf] %vm1478, %v1415
      %1545 = vst.msk [vmem:[%s223 + $0x108] sm:$0xf] %vm1478, %v1416
      %1546 = vst.msk [vmem:[%s223 + $0x10c] sm:$0xf] %vm1478, %v1417
      %1547 = vst.msk [vmem:[%s223 + $0x110] sm:$0xf] %vm1478, %v1418
      %1548 = vst.msk [vmem:[%s223 + $0x114] sm:$0xf] %vm1478, %v1419
      %1549 = vst.msk [vmem:[%s223 + $0x118] sm:$0xf] %vm1478, %v1420
      %1550 = vst.msk [vmem:[%s223 + $0x11c] sm:$0xf] %vm1478, %v1421
      %1551 = vst.msk [vmem:[%s223 + $0x120] sm:$0xf] %vm1478, %v1422
      %1552 = vst.msk [vmem:[%s223 + $0x124] sm:$0xf] %vm1478, %v1423
      %1553 = vst.msk [vmem:[%s223 + $0x128] sm:$0xf] %vm1478, %v1424
      %1554 = vst.msk [vmem:[%s223 + $0x12c] sm:$0xf] %vm1478, %v1425
      %1555 = vst.msk [vmem:[%s223 + $0x130] sm:$0xf] %vm1478, %v1426
      %1556 = vst.msk [vmem:[%s223 + $0x134] sm:$0xf] %vm1478, %v1427
      %1557 = vst.msk [vmem:[%s223 + $0x138] sm:$0xf] %vm1478, %v1428
      %1558 = vst.msk [vmem:[%s223 + $0x13c] sm:$0xf] %vm1478, %v1429
      %1559 = vst.msk [vmem:[%s223 + $0x140] sm:$0xf] %vm1478, %v1430
      %1560 = vst.msk [vmem:[%s223 + $0x144] sm:$0xf] %vm1478, %v1431
      %1561 = vst.msk [vmem:[%s223 + $0x148] sm:$0xf] %vm1478, %v1432
      %1562 = vst.msk [vmem:[%s223 + $0x14c] sm:$0xf] %vm1478, %v1433
      %1563 = vst.msk [vmem:[%s223 + $0x150] sm:$0xf] %vm1478, %v1434
      %1564 = vst.msk [vmem:[%s223 + $0x154] sm:$0xf] %vm1478, %v1435
      %1565 = vst.msk [vmem:[%s223 + $0x158] sm:$0xf] %vm1478, %v1436
      %1566 = vst.msk [vmem:[%s223 + $0x15c] sm:$0xf] %vm1478, %v1437
      %1567 = vst.msk [vmem:[%s223 + $0x160] sm:$0xf] %vm1478, %v1438
      %1568 = vst.msk [vmem:[%s223 + $0x164] sm:$0xf] %vm1478, %v1439
      %1569 = vst.msk [vmem:[%s223 + $0x168] sm:$0xf] %vm1478, %v1440
      %1570 = vst.msk [vmem:[%s223 + $0x16c] sm:$0xf] %vm1478, %v1441
      %1571 = vst.msk [vmem:[%s223 + $0x170] sm:$0xf] %vm1478, %v1442
      %1572 = vst.msk [vmem:[%s223 + $0x174] sm:$0xf] %vm1478, %v1443
      %1573 = vst.msk [vmem:[%s223 + $0x178] sm:$0xf] %vm1478, %v1444
      %1574 = vst.msk [vmem:[%s223 + $0x17c] sm:$0xf] %vm1478, %v1445
      %1575 = vst.msk [vmem:[%s223 + $0x180] sm:$0xf] %vm1478, %v1446
      %1576 = vst.msk [vmem:[%s223 + $0x184] sm:$0xf] %vm1478, %v1447
      %1577 = vst.msk [vmem:[%s223 + $0x188] sm:$0xf] %vm1478, %v1448
      %1578 = vst.msk [vmem:[%s223 + $0x18c] sm:$0xf] %vm1478, %v1449
      %1579 = vst.msk [vmem:[%s223 + $0x190] sm:$0xf] %vm1478, %v1450
      %1580 = vst.msk [vmem:[%s223 + $0x194] sm:$0xf] %vm1478, %v1451
      %1581 = vst.msk [vmem:[%s223 + $0x198] sm:$0xf] %vm1478, %v1452
      %1582 = vst.msk [vmem:[%s223 + $0x19c] sm:$0xf] %vm1478, %v1453
      %1583 = vst.msk [vmem:[%s223 + $0x1a0] sm:$0xf] %vm1478, %v1454
      %1584 = vst.msk [vmem:[%s223 + $0x1a4] sm:$0xf] %vm1478, %v1455
      %1585 = vst.msk [vmem:[%s223 + $0x1a8] sm:$0xf] %vm1478, %v1456
      %1586 = vst.msk [vmem:[%s223 + $0x1ac] sm:$0xf] %vm1478, %v1457
      %1587 = vst.msk [vmem:[%s223 + $0x1b0] sm:$0xf] %vm1478, %v1458
      %1588 = vst.msk [vmem:[%s223 + $0x1b4] sm:$0xf] %vm1478, %v1459
      %1589 = vst.msk [vmem:[%s223 + $0x1b8] sm:$0xf] %vm1478, %v1460
      %1590 = vst.msk [vmem:[%s223 + $0x1bc] sm:$0xf] %vm1478, %v1461
      %1591 = vst.msk [vmem:[%s223 + $0x1c0] sm:$0xf] %vm1478, %v1462
      %1592 = vst.msk [vmem:[%s223 + $0x1c4] sm:$0xf] %vm1478, %v1463
      %1593 = vst.msk [vmem:[%s223 + $0x1c8] sm:$0xf] %vm1478, %v1464
      %1594 = vst.msk [vmem:[%s223 + $0x1cc] sm:$0xf] %vm1478, %v1465
      %1595 = vst.msk [vmem:[%s223 + $0x1d0] sm:$0xf] %vm1478, %v1466
      %1596 = vst.msk [vmem:[%s223 + $0x1d4] sm:$0xf] %vm1478, %v1467
      %1597 = vst.msk [vmem:[%s223 + $0x1d8] sm:$0xf] %vm1478, %v1468
      %1598 = vst.msk [vmem:[%s223 + $0x1dc] sm:$0xf] %vm1478, %v1469
      %1599 = vst.msk [vmem:[%s223 + $0x1e0] sm:$0xf] %vm1478, %v1470
      %1600 = vst.msk [vmem:[%s223 + $0x1e4] sm:$0xf] %vm1478, %v1471
      %1601 = vst.msk [vmem:[%s223 + $0x1e8] sm:$0xf] %vm1478, %v1472
      %1602 = vst.msk [vmem:[%s223 + $0x1ec] sm:$0xf] %vm1478, %v1473
      %1603 = vst.msk [vmem:[%s223 + $0x1f0] sm:$0xf] %vm1478, %v1474
      %1604 = vst.msk [vmem:[%s223 + $0x1f4] sm:$0xf] %vm1478, %v1475
      %1605 = vst.msk [vmem:[%s223 + $0x1f8] sm:$0xf] %vm1478, %v1476
      %1606 = vst.msk [vmem:[%s223 + $0x1fc] sm:$0xf] %vm1478, %v1477
      %s1607 = smul.u32 128, %s18
      %p1608 = scmp.lt.s32.totalorder %s1607, 6271
      %s1609 = scalar_select %p1608, %s1607, 6271
      %p1610 = scmp.lt.s32.totalorder %s19, 0
      %s1611 = scalar_select %p1610, %s19, 0
      %s1612 = sadd.s32 %s1611, %s1609
      %s1613 = smul.addr %s1612, 4
      %s1614 = scalar_lea.vmem %s3, %s1613
      // Predicated region
      $region33: #{tpu_custom_call.1} parent=31 // pred_check
        %p1615 = pneg %p124
      $region34: #{tpu_custom_call.1} parent=31 // pred_check_branch
        %1617 = sbr.rel (%p1615) target = $region36
      $region35: #{tpu_custom_call.1} parent=31 // pred_region
        %s1618 = smul.u32 128, %s18
      $region36: #{tpu_custom_call.1} parent=31 // pred_fallthru
        _
    $region32: #{tpu_custom_call.1} parent=5 // pred_fallthru
      _
    %p1619 = scmp.le.s32.totalorder 2, %s9
    // Predicated region
    $region37: #{tpu_custom_call.1} parent=5 // pred_check
      %p1620 = pneg %p1619
    $region38: #{tpu_custom_call.1} parent=5 // pred_check_branch
      %1622 = sbr.rel (%p1620) target = $region40
    $region39: #{tpu_custom_call.1} parent=5 // pred_region
      %s1623 = ssub.s32 %s9, 2
      // Predicated region
      $region41: #{tpu_custom_call.1} parent=39 // pred_check
        %p1624 = pneg %p130
      $region42: #{tpu_custom_call.1} parent=39 // pred_check_branch
        %1626 = sbr.rel (%p1624) target = $region44
      $region43: #{tpu_custom_call.1} parent=39 // pred_region
        %s1627 = smul.u32 128, %s20
        %p1628 = scmp.lt.s32.totalorder %s1627, 6271
        %s1629 = scalar_select %p1628, %s1627, 6271
        %p1630 = scmp.lt.s32.totalorder %s21, 0
        %s1631 = scalar_select %p1630, %s21, 0
        %s1632 = sadd.s32 %s1631, %s1629
        %s1633 = smul.addr %s1632, 4
        %s1634 = scalar_lea.vmem %s3, %s1633
      $region44: #{tpu_custom_call.1} parent=39 // pred_fallthru
        _
    $region40: #{tpu_custom_call.1} parent=5 // pred_fallthru
      _
  $region6: #{tpu_custom_call.1} parent=0 // loop_footer
    %s13 = sadd.s32 1, %s9
  $region7: #{tpu_custom_call.1} parent=0 // loop_footer_branch
    %8 = sbr.rel target = $region3
  $region8: #{tpu_custom_call.1} parent=0 // loop_exit
    _

</llo_original>
